<compile_context>
chip_gen: v6e
topology: v6e:2x2x1
jax: 0.10.0
libtpu: 0.0.40
codegen_flags: <defaults>
</compile_context>

<pallas_src>
import jax
import jax.numpy as jnp
import numpy as np
from jax.experimental import pallas as pl
from jax.experimental.pallas import tpu as pltpu

SIDE = 8                        # Reversi board side
IN_DIM = SIDE * SIDE * 2        # 128
OUT_DIM = SIDE * SIDE           # 64
PAD_OUT = 128                   # lane-padded width of the stacked last-layer weight
GROUP = 8                       # rows per softmax group (original batch dim)
NUM_BLOCKS = 2                  # num_blocks
HIDDEN = 128                    # hidden_layer_width
NUM_W = 2 * NUM_BLOCKS + 2      # stacked weight count: first, (a,b)*blocks, last


def policy_kernel(x_ref, mask_ref, w_ref, b_ref, out_ref):
    gpt = x_ref.shape[0]                 # groups in this tile (static)
    rows = gpt * GROUP                   # fused matmul M dimension

    # Flatten groups into one tall-M activation slab; bf16 operands, f32 acc.
    x = x_ref[...].reshape(rows, IN_DIM).astype(jnp.bfloat16)

    # first_layer: Linear(IN_DIM, HIDDEN) + ReLU
    h = jnp.dot(x, w_ref[0, :, :], preferred_element_type=jnp.float32)
    h = jnp.maximum(h + b_ref[0, :, :], 0.0)

    # middle_layers: NUM_BLOCKS x Linear_skip_block
    #   relu(x + Linear(relu(Linear(x))))
    for i in range(NUM_BLOCKS):          # static unroll (small, fixed count)
        t = jnp.dot(h.astype(jnp.bfloat16), w_ref[1 + 2 * i, :, :],
                    preferred_element_type=jnp.float32)
        t = jnp.maximum(t + b_ref[1 + 2 * i, :, :], 0.0)
        t = jnp.dot(t.astype(jnp.bfloat16), w_ref[2 + 2 * i, :, :],
                    preferred_element_type=jnp.float32)
        t = t + b_ref[2 + 2 * i, :, :]
        h = jnp.maximum(h + t, 0.0)

    # last_layer: stacked weight is zero-padded to 128 lanes so the matmul is
    # lane-dense; only the first OUT_DIM logit lanes are kept for the softmax.
    last = 2 * NUM_BLOCKS + 1
    logits = jnp.dot(h.astype(jnp.bfloat16), w_ref[last, :, :],
                     preferred_element_type=jnp.float32)
    logits = logits + b_ref[last, :, :]
    logits = logits[:, :OUT_DIM].reshape(gpt, GROUP, OUT_DIM) + mask_ref[...]

    # Softmax(dim=0) within each 8-row group (axis=1 of the grouped layout).
    m = jnp.max(logits, axis=1, keepdims=True)
    e = jnp.exp(logits - m)
    denom = jnp.sum(e, axis=1, keepdims=True)
    out_ref[...] = e * pl.reciprocal(denom, approx=False)   # exact reciprocal


def pack_params(params):
    """Pack per-layer weights/biases into stacked tensors (weights in bf16)."""
    (w1, b1, wa, ba, wb, bb, wl, bl) = params
    wl_p = jnp.pad(wl, ((0, 0), (0, PAD_OUT - OUT_DIM)))
    bl_p = jnp.pad(bl, ((0, 0), (0, PAD_OUT - OUT_DIM)))
    ws, bs = [w1], [b1]
    for i in range(NUM_BLOCKS):
        ws += [wa[i], wb[i]]
        bs += [ba[i], bb[i]]
    ws.append(wl_p)
    bs.append(bl_p)
    w_stack = jnp.stack(ws).astype(jnp.bfloat16)   # [NUM_W, 128, 128] bf16
    b_stack = jnp.stack(bs).astype(jnp.float32)    # [NUM_W, 1, 128]   f32
    return w_stack, b_stack


def reversi_policy(x, mask, params, *, groups_per_tile=256):
    """x: [G, 8, 128], mask: [G, 8, 64]  ->  [G, 8, 64] softmax policy."""
    w_stack, b_stack = pack_params(params)
    G = x.shape[0]
    # Keep >= 2 grid steps whenever possible so the "parallel" axis actually
    # splits across v7x's two TensorCores; otherwise use the largest tile asked.
    gpt = int(max(1, min(groups_per_tile, pl.cdiv(G, 2))))
    num_tiles = int(pl.cdiv(G, gpt))
    Gp = num_tiles * gpt

    if Gp != G:   # pad group axis to a tile multiple (sliced off at the end)
        x = jnp.pad(x, ((0, Gp - G), (0, 0), (0, 0)))
        mask = jnp.pad(mask, ((0, Gp - G), (0, 0), (0, 0)))

    # Per-step tile bytes (double-buffered in/out) + resident weights, + headroom
    # for in-kernel activations; capped at v7x physical VMEM.
    x_tile = gpt * GROUP * IN_DIM * 4
    mask_tile = gpt * GROUP * OUT_DIM * 4
    out_tile = gpt * GROUP * OUT_DIM * 4
    w_bytes = NUM_W * HIDDEN * HIDDEN * 2 + NUM_W * HIDDEN * 4
    vmem_limit = int(min(2 * (x_tile + mask_tile + out_tile) + 2 * w_bytes
                         + (24 << 20),
                         64 << 20))

    rows_total = Gp * GROUP
    cost = pl.CostEstimate(
        flops=int(2 * NUM_W * rows_total * HIDDEN * HIDDEN),
        transcendentals=int(rows_total * OUT_DIM),          # exp in the softmax
        bytes_accessed=int(Gp * GROUP * (IN_DIM + 2 * OUT_DIM) * 4 + w_bytes),
    )

    out = pl.pallas_call(
        policy_kernel,
        out_shape=jax.ShapeDtypeStruct((Gp, GROUP, OUT_DIM), jnp.float32),
        grid_spec=pltpu.PrefetchScalarGridSpec(
            num_scalar_prefetch=0,
            grid=(num_tiles,),
            in_specs=[
                pl.BlockSpec((gpt, GROUP, IN_DIM), lambda g: (g, 0, 0)),
                # mask stays at its natural 64-lane width (== full array dim).
                pl.BlockSpec((gpt, GROUP, OUT_DIM), lambda g: (g, 0, 0)),
                # Weights/biases: same block every step -> DMA once, stay resident.
                pl.BlockSpec((NUM_W, HIDDEN, HIDDEN), lambda g: (0, 0, 0)),
                pl.BlockSpec((NUM_W, 1, HIDDEN), lambda g: (0, 0, 0)),
            ],
            out_specs=pl.BlockSpec((gpt, GROUP, OUT_DIM), lambda g: (g, 0, 0)),
        ),
        compiler_params=pltpu.CompilerParams(
            dimension_semantics=("parallel",),   # shard groups across TCs on v7x
            vmem_limit_bytes=vmem_limit),
        cost_estimate=cost,
    )(x, mask, w_stack, b_stack)

    return out if Gp == G else out[:G]


def init_params(key):
    ks = jax.random.split(key, 8)
    s = 0.05
    w1 = jax.random.normal(ks[0], (IN_DIM, HIDDEN), jnp.float32) * s
    b1 = jax.random.normal(ks[1], (1, HIDDEN), jnp.float32) * s
    wa = jax.random.normal(ks[2], (NUM_BLOCKS, HIDDEN, HIDDEN), jnp.float32) * s
    ba = jax.random.normal(ks[3], (NUM_BLOCKS, 1, HIDDEN), jnp.float32) * s
    wb = jax.random.normal(ks[4], (NUM_BLOCKS, HIDDEN, HIDDEN), jnp.float32) * s
    bb = jax.random.normal(ks[5], (NUM_BLOCKS, 1, HIDDEN), jnp.float32) * s
    wl = jax.random.normal(ks[6], (HIDDEN, OUT_DIM), jnp.float32) * s
    bl = jax.random.normal(ks[7], (1, OUT_DIM), jnp.float32) * s
    return (w1, b1, wa, ba, wb, bb, wl, bl)


def reference(x, mask, params):
    # Pure-JAX f32 reference mirroring the PyTorch forward, per 8-row group.
    (w1, b1, wa, ba, wb, bb, wl, bl) = params
    G, B, _ = x.shape
    h = jnp.maximum(x.reshape(G * B, IN_DIM) @ w1 + b1, 0.0)
    for i in range(NUM_BLOCKS):
        t = jnp.maximum(h @ wa[i] + ba[i], 0.0)
        t = t @ wb[i] + bb[i]
        h = jnp.maximum(h + t, 0.0)
    logits = (h @ wl + bl).reshape(G, B, OUT_DIM) + mask
    return jax.nn.softmax(logits, axis=1)   # dim=0 within each group


if __name__ == "__main__":
    key = jax.random.PRNGKey(0)
    kx, km, kp = jax.random.split(key, 3)

    G = 64                          # 64 independent 8-board groups per call
    x = jax.random.normal(kx, (G, GROUP, IN_DIM), jnp.float32)
    # mask: 0 for legal moves, large negative for illegal moves (typical usage)
    legal = jax.random.bernoulli(km, 0.5, (G, GROUP, OUT_DIM))
    mask = jnp.where(legal, 0.0, -1e9).astype(jnp.float32)
    params = init_params(kp)

    out = reversi_policy(x, mask, params)   # G=64 -> 2 grid steps of 32 groups
    out = jax.block_until_ready(out)

    ref = reference(x, mask, params)
    # bf16 matmul operands with f32 accumulation: relaxed tolerance vs f32 ref.
    np.testing.assert_allclose(np.asarray(out), np.asarray(ref),
                               rtol=2e-2, atol=2e-2)
    print("KERNEL_OK")
</pallas_src>

<mosaic_0001>
module attributes {stable_mosaic.version = 11 : i64} {
  func.func @policy_kernel(%arg0: i32, %arg1: memref<32x8x128xf32, #tpu.memory_space<vmem>>, %arg2: memref<32x8x64xf32, #tpu.memory_space<vmem>>, %arg3: memref<6x128x128xbf16, #tpu.memory_space<vmem>>, %arg4: memref<6x1x128xf32, #tpu.memory_space<vmem>>, %arg5: memref<32x8x64xf32, #tpu.memory_space<vmem>>) attributes {dimension_semantics = [#tpu.dimension_semantics<parallel>], iteration_bounds = array<i64: 2>, scalar_prefetch = 0 : i64, scratch_operands = 0 : i64, tpu.core_type = #tpu.core_type<tc>, window_params = [{transform_indices = @transform_0, window_bounds = array<i64: 32, 8, 128>}, {transform_indices = @transform_1, window_bounds = array<i64: 32, 8, 64>}, {pipeline_mode = #tpu.pipeline_mode<synchronous>, transform_indices = @transform_2, window_bounds = array<i64: 6, 128, 128>}, {pipeline_mode = #tpu.pipeline_mode<synchronous>, transform_indices = @transform_3, window_bounds = array<i64: 6, 1, 128>}, {transform_indices = @transform_4, window_bounds = array<i64: 32, 8, 64>}]} {
    %c0 = arith.constant 0 : index
    %c0_0 = arith.constant 0 : index
    %c0_1 = arith.constant 0 : index
    %0 = vector.load %arg1[%c0, %c0_0, %c0_1] : memref<32x8x128xf32, #tpu.memory_space<vmem>>, vector<32x8x128xf32>
    %1 = vector.shape_cast %0 : vector<32x8x128xf32> to vector<256x128xf32>
    %2 = arith.truncf %1 : vector<256x128xf32> to vector<256x128xbf16>
    %c0_2 = arith.constant 0 : index
    %c0_3 = arith.constant 0 : index
    %c0_4 = arith.constant 0 : index
    %3 = vector.load %arg3[%c0_2, %c0_3, %c0_4] : memref<6x128x128xbf16, #tpu.memory_space<vmem>>, vector<1x128x128xbf16>
    %4 = vector.shape_cast %3 : vector<1x128x128xbf16> to vector<128x128xbf16>
    %cst = arith.constant dense<0.000000e+00> : vector<256x128xf32>
    %5 = tpu.matmul %2, %4, %cst {dimension_numbers = #tpu.dot_dimension_numbers<[1], [0], [0], [1], [0, 0, 1, 1], [], []>} : vector<256x128xbf16>, vector<128x128xbf16>, vector<256x128xf32> -> vector<256x128xf32>
    %c0_5 = arith.constant 0 : index
    %c0_6 = arith.constant 0 : index
    %c0_7 = arith.constant 0 : index
    %6 = vector.load %arg4[%c0_5, %c0_6, %c0_7] : memref<6x1x128xf32, #tpu.memory_space<vmem>>, vector<1x1x128xf32>
    %7 = vector.shape_cast %6 : vector<1x1x128xf32> to vector<1x128xf32>
    %8 = vector.broadcast %7 : vector<1x128xf32> to vector<256x128xf32>
    %9 = arith.addf %5, %8 : vector<256x128xf32>
    %cst_8 = arith.constant 0.000000e+00 : f32
    %10 = vector.broadcast %cst_8 : f32 to vector<256x128xf32>
    %11 = arith.maximumf %9, %10 : vector<256x128xf32>
    %12 = arith.truncf %11 : vector<256x128xf32> to vector<256x128xbf16>
    %c1 = arith.constant 1 : index
    %c0_9 = arith.constant 0 : index
    %c0_10 = arith.constant 0 : index
    %13 = vector.load %arg3[%c1, %c0_9, %c0_10] : memref<6x128x128xbf16, #tpu.memory_space<vmem>>, vector<1x128x128xbf16>
    %14 = vector.shape_cast %13 : vector<1x128x128xbf16> to vector<128x128xbf16>
    %cst_11 = arith.constant dense<0.000000e+00> : vector<256x128xf32>
    %15 = tpu.matmul %12, %14, %cst_11 {dimension_numbers = #tpu.dot_dimension_numbers<[1], [0], [0], [1], [0, 0, 1, 1], [], []>} : vector<256x128xbf16>, vector<128x128xbf16>, vector<256x128xf32> -> vector<256x128xf32>
    %c1_12 = arith.constant 1 : index
    %c0_13 = arith.constant 0 : index
    %c0_14 = arith.constant 0 : index
    %16 = vector.load %arg4[%c1_12, %c0_13, %c0_14] : memref<6x1x128xf32, #tpu.memory_space<vmem>>, vector<1x1x128xf32>
    %17 = vector.shape_cast %16 : vector<1x1x128xf32> to vector<1x128xf32>
    %18 = vector.broadcast %17 : vector<1x128xf32> to vector<256x128xf32>
    %19 = arith.addf %15, %18 : vector<256x128xf32>
    %cst_15 = arith.constant 0.000000e+00 : f32
    %20 = vector.broadcast %cst_15 : f32 to vector<256x128xf32>
    %21 = arith.maximumf %19, %20 : vector<256x128xf32>
    %22 = arith.truncf %21 : vector<256x128xf32> to vector<256x128xbf16>
    %c2 = arith.constant 2 : index
    %c0_16 = arith.constant 0 : index
    %c0_17 = arith.constant 0 : index
    %23 = vector.load %arg3[%c2, %c0_16, %c0_17] : memref<6x128x128xbf16, #tpu.memory_space<vmem>>, vector<1x128x128xbf16>
    %24 = vector.shape_cast %23 : vector<1x128x128xbf16> to vector<128x128xbf16>
    %cst_18 = arith.constant dense<0.000000e+00> : vector<256x128xf32>
    %25 = tpu.matmul %22, %24, %cst_18 {dimension_numbers = #tpu.dot_dimension_numbers<[1], [0], [0], [1], [0, 0, 1, 1], [], []>} : vector<256x128xbf16>, vector<128x128xbf16>, vector<256x128xf32> -> vector<256x128xf32>
    %c2_19 = arith.constant 2 : index
    %c0_20 = arith.constant 0 : index
    %c0_21 = arith.constant 0 : index
    %26 = vector.load %arg4[%c2_19, %c0_20, %c0_21] : memref<6x1x128xf32, #tpu.memory_space<vmem>>, vector<1x1x128xf32>
    %27 = vector.shape_cast %26 : vector<1x1x128xf32> to vector<1x128xf32>
    %28 = vector.broadcast %27 : vector<1x128xf32> to vector<256x128xf32>
    %29 = arith.addf %25, %28 : vector<256x128xf32>
    %30 = arith.addf %11, %29 : vector<256x128xf32>
    %cst_22 = arith.constant 0.000000e+00 : f32
    %31 = vector.broadcast %cst_22 : f32 to vector<256x128xf32>
    %32 = arith.maximumf %30, %31 : vector<256x128xf32>
    %33 = arith.truncf %32 : vector<256x128xf32> to vector<256x128xbf16>
    %c3 = arith.constant 3 : index
    %c0_23 = arith.constant 0 : index
    %c0_24 = arith.constant 0 : index
    %34 = vector.load %arg3[%c3, %c0_23, %c0_24] : memref<6x128x128xbf16, #tpu.memory_space<vmem>>, vector<1x128x128xbf16>
    %35 = vector.shape_cast %34 : vector<1x128x128xbf16> to vector<128x128xbf16>
    %cst_25 = arith.constant dense<0.000000e+00> : vector<256x128xf32>
    %36 = tpu.matmul %33, %35, %cst_25 {dimension_numbers = #tpu.dot_dimension_numbers<[1], [0], [0], [1], [0, 0, 1, 1], [], []>} : vector<256x128xbf16>, vector<128x128xbf16>, vector<256x128xf32> -> vector<256x128xf32>
    %c3_26 = arith.constant 3 : index
    %c0_27 = arith.constant 0 : index
    %c0_28 = arith.constant 0 : index
    %37 = vector.load %arg4[%c3_26, %c0_27, %c0_28] : memref<6x1x128xf32, #tpu.memory_space<vmem>>, vector<1x1x128xf32>
    %38 = vector.shape_cast %37 : vector<1x1x128xf32> to vector<1x128xf32>
    %39 = vector.broadcast %38 : vector<1x128xf32> to vector<256x128xf32>
    %40 = arith.addf %36, %39 : vector<256x128xf32>
    %cst_29 = arith.constant 0.000000e+00 : f32
    %41 = vector.broadcast %cst_29 : f32 to vector<256x128xf32>
    %42 = arith.maximumf %40, %41 : vector<256x128xf32>
    %43 = arith.truncf %42 : vector<256x128xf32> to vector<256x128xbf16>
    %c4 = arith.constant 4 : index
    %c0_30 = arith.constant 0 : index
    %c0_31 = arith.constant 0 : index
    %44 = vector.load %arg3[%c4, %c0_30, %c0_31] : memref<6x128x128xbf16, #tpu.memory_space<vmem>>, vector<1x128x128xbf16>
    %45 = vector.shape_cast %44 : vector<1x128x128xbf16> to vector<128x128xbf16>
    %cst_32 = arith.constant dense<0.000000e+00> : vector<256x128xf32>
    %46 = tpu.matmul %43, %45, %cst_32 {dimension_numbers = #tpu.dot_dimension_numbers<[1], [0], [0], [1], [0, 0, 1, 1], [], []>} : vector<256x128xbf16>, vector<128x128xbf16>, vector<256x128xf32> -> vector<256x128xf32>
    %c4_33 = arith.constant 4 : index
    %c0_34 = arith.constant 0 : index
    %c0_35 = arith.constant 0 : index
    %47 = vector.load %arg4[%c4_33, %c0_34, %c0_35] : memref<6x1x128xf32, #tpu.memory_space<vmem>>, vector<1x1x128xf32>
    %48 = vector.shape_cast %47 : vector<1x1x128xf32> to vector<1x128xf32>
    %49 = vector.broadcast %48 : vector<1x128xf32> to vector<256x128xf32>
    %50 = arith.addf %46, %49 : vector<256x128xf32>
    %51 = arith.addf %32, %50 : vector<256x128xf32>
    %cst_36 = arith.constant 0.000000e+00 : f32
    %52 = vector.broadcast %cst_36 : f32 to vector<256x128xf32>
    %53 = arith.maximumf %51, %52 : vector<256x128xf32>
    %54 = arith.truncf %53 : vector<256x128xf32> to vector<256x128xbf16>
    %c5 = arith.constant 5 : index
    %c0_37 = arith.constant 0 : index
    %c0_38 = arith.constant 0 : index
    %55 = vector.load %arg3[%c5, %c0_37, %c0_38] : memref<6x128x128xbf16, #tpu.memory_space<vmem>>, vector<1x128x128xbf16>
    %56 = vector.shape_cast %55 : vector<1x128x128xbf16> to vector<128x128xbf16>
    %cst_39 = arith.constant dense<0.000000e+00> : vector<256x128xf32>
    %57 = tpu.matmul %54, %56, %cst_39 {dimension_numbers = #tpu.dot_dimension_numbers<[1], [0], [0], [1], [0, 0, 1, 1], [], []>} : vector<256x128xbf16>, vector<128x128xbf16>, vector<256x128xf32> -> vector<256x128xf32>
    %c5_40 = arith.constant 5 : index
    %c0_41 = arith.constant 0 : index
    %c0_42 = arith.constant 0 : index
    %58 = vector.load %arg4[%c5_40, %c0_41, %c0_42] : memref<6x1x128xf32, #tpu.memory_space<vmem>>, vector<1x1x128xf32>
    %59 = vector.shape_cast %58 : vector<1x1x128xf32> to vector<1x128xf32>
    %60 = vector.broadcast %59 : vector<1x128xf32> to vector<256x128xf32>
    %61 = arith.addf %57, %60 : vector<256x128xf32>
    %62 = vector.extract_strided_slice %61 {offsets = [0, 0], sizes = [256, 64], strides = [1, 1]} : vector<256x128xf32> to vector<256x64xf32>
    %63 = vector.shape_cast %62 : vector<256x64xf32> to vector<32x8x64xf32>
    %c0_43 = arith.constant 0 : index
    %c0_44 = arith.constant 0 : index
    %c0_45 = arith.constant 0 : index
    %64 = vector.load %arg2[%c0_43, %c0_44, %c0_45] : memref<32x8x64xf32, #tpu.memory_space<vmem>>, vector<32x8x64xf32>
    %65 = arith.addf %63, %64 : vector<32x8x64xf32>
    %cst_46 = arith.constant dense<0xFF800000> : vector<32x64xf32>
    %66 = vector.multi_reduction <maximumf>, %65, %cst_46 [1] : vector<32x8x64xf32> to vector<32x64xf32>
    %67 = vector.shape_cast %66 : vector<32x64xf32> to vector<32x1x64xf32>
    %68 = vector.broadcast %67 : vector<32x1x64xf32> to vector<32x8x64xf32>
    %69 = arith.subf %65, %68 : vector<32x8x64xf32>
    %70 = math.exp %69 : vector<32x8x64xf32>
    %cst_47 = arith.constant dense<0.000000e+00> : vector<32x64xf32>
    %71 = vector.multi_reduction <add>, %70, %cst_47 [1] : vector<32x8x64xf32> to vector<32x64xf32>
    %72 = vector.shape_cast %71 : vector<32x64xf32> to vector<32x1x64xf32>
    %73 = tpu.reciprocal %72 : vector<32x1x64xf32> -> vector<32x1x64xf32>
    %74 = vector.broadcast %73 : vector<32x1x64xf32> to vector<32x8x64xf32>
    %75 = arith.mulf %70, %74 : vector<32x8x64xf32>
    %c0_48 = arith.constant 0 : index
    %c0_49 = arith.constant 0 : index
    %c0_50 = arith.constant 0 : index
    %76 = vector.load %arg5[%c0_48, %c0_49, %c0_50] : memref<32x8x64xf32, #tpu.memory_space<vmem>>, vector<32x8x64xf32>
    tpu.vector_store %arg5[%c0_48, %c0_49, %c0_50], %75 {strides = array<i32>} : memref<32x8x64xf32, #tpu.memory_space<vmem>>, vector<32x8x64xf32>,
    return
  }
  func.func @transform_0(%arg0: i32) -> (i32, i32, i32) {
    %c0_i32 = arith.constant 0 : i32
    %c0_i32_0 = arith.constant 0 : i32
    %c0_i32_1 = arith.constant 0 : i32
    return %arg0, %c0_i32, %c0_i32_0 : i32, i32, i32
  }
  func.func @transform_1(%arg0: i32) -> (i32, i32, i32) {
    %c0_i32 = arith.constant 0 : i32
    %c0_i32_0 = arith.constant 0 : i32
    %c0_i32_1 = arith.constant 0 : i32
    return %arg0, %c0_i32, %c0_i32_0 : i32, i32, i32
  }
  func.func @transform_2(%arg0: i32) -> (i32, i32, i32) {
    %c0_i32 = arith.constant 0 : i32
    %c0_i32_0 = arith.constant 0 : i32
    %c0_i32_1 = arith.constant 0 : i32
    %c0_i32_2 = arith.constant 0 : i32
    return %c0_i32, %c0_i32_0, %c0_i32_1 : i32, i32, i32
  }
  func.func @transform_3(%arg0: i32) -> (i32, i32, i32) {
    %c0_i32 = arith.constant 0 : i32
    %c0_i32_0 = arith.constant 0 : i32
    %c0_i32_1 = arith.constant 0 : i32
    %c0_i32_2 = arith.constant 0 : i32
    return %c0_i32, %c0_i32_0, %c0_i32_1 : i32, i32, i32
  }
  func.func @transform_4(%arg0: i32) -> (i32, i32, i32) {
    %c0_i32 = arith.constant 0 : i32
    %c0_i32_0 = arith.constant 0 : i32
    %c0_i32_1 = arith.constant 0 : i32
    return %arg0, %c0_i32, %c0_i32_0 : i32, i32, i32
  }
}

</mosaic_0001>

<llo_original>
// kernel: tpu_custom_call.1
$region0: #{tpu_custom_call.1}
  #allocation0 [shape = 'u32[]', space=smem, size = 0x4, offset = 0x4, fixed_abs, tag = 'smem constant byte address 0x4 - core index']
  #allocation1 [shape = 'u32[144,128]{1,0:T(1,128)}', space=vmem, size = 0x12000, scoped, tag = 'internal scratch']
  %s0 = inlined_call_operand.hbm [shape: f32[64,8,128], index: 0, kind: input, shape index: {}]
  %s1 = inlined_call_operand.hbm [shape: f32[64,8,64], index: 1, kind: input, shape index: {}]
  %s2 = inlined_call_operand.hbm [shape: bf16[6,128,128], index: 2, kind: input, shape index: {}]
  %s3 = inlined_call_operand.hbm [shape: f32[6,1,128], index: 3, kind: input, shape index: {}]
  %s4 = inlined_call_operand.hbm [shape: f32[64,8,64], index: 4, kind: output, shape index: {}]
  %s5 = sld [smem:[#allocation0]]
  $region65: #{tpu_custom_call.1} parent=0
    _
  %s7 = ssub.s32 1, %s5
  %s8 = scalar_select 0, %s7, %s5
  $region1: #{tpu_custom_call.1} parent=0
    #allocation2 [shape = 'u8[262144]{0}', space=vmem, size = 0x40000, scoped, tag = 'input window, operand 0']
    #allocation3 [shape = 's32[2]{0}', space=sflag, size = 0x8, scoped, tag = 'scoped memory for tpu_custom_call.1']
    #allocation4 [shape = 's32[2]{0}', space=sflag, size = 0x8, scoped, tag = 'scoped memory for tpu_custom_call.1']
    #allocation5 [shape = 'u8[262144]{0}', space=vmem, size = 0x40000, scoped, tag = 'input window, operand 1']
    #allocation6 [shape = 's32[2]{0}', space=sflag, size = 0x8, scoped, tag = 'scoped memory for tpu_custom_call.1']
    #allocation7 [shape = 'u8[196608]{0}', space=vmem, size = 0x30000, scoped, tag = 'input window, operand 2, single buffered']
    #allocation8 [shape = 'u8[3072]{0}', space=vmem, size = 0xc00, scoped, tag = 'input window, operand 3, single buffered']
    #allocation9 [shape = 's32[1]{0}', space=sflag, size = 0x4, scoped, tag = 'scoped memory for tpu_custom_call.1']
    #allocation10 [shape = 'u8[262144]{0}', space=vmem, size = 0x40000, scoped, tag = 'output window, operand 0']
    %9 = vsyncpa [#allocation3], 0
    %s10 = scalar_lea.sflag [#allocation3], 1
    %11 = vsyncpa %s10, 0
    %12 = vsyncpa [#allocation6], 0
    %s13 = scalar_lea.sflag [#allocation6], 1
    %14 = vsyncpa %s13, 0
    %15 = vsyncpa [#allocation9], 0
    %16 = vsyncpa [#allocation4], 0
    %s17 = scalar_lea.sflag [#allocation4], 1
    %18 = vsyncpa %s17, 0
    loop: start=0, step=1, limit=4
    $region2: #{tpu_custom_call.1} parent=1 // loop_pre_header
      _
    $region3: #{tpu_custom_call.1} parent=1 // loop_header
      %s20 = sphi 0, %s24
      %p21 = scmp.ge.s32.totalorder %s20, 4
      %s30 = sphi 0, %s32
      %s33 = sphi 0, %s30
      %s34 = sphi 0, %s33
      %s50 = sphi 0, %s34
      %s56 = sphi 0, %s58
      %s59 = sphi 0, %s56
      %s60 = sphi 0, %s59
      %s76 = sphi 0, %s60
      %s80 = sphi 0, %s80
      %s82 = sphi 0, %s80
      %s83 = sphi 0, %s82
      %s97 = sphi 0, %s83
      %s101 = sphi 0, %s101
      %s103 = sphi 0, %s101
      %s104 = sphi 0, %s103
      %s118 = sphi 0, %s104
      %s124 = sphi 0, %s126
      %s127 = sphi 0, %s124
      %s128 = sphi 0, %s127
      %s144 = sphi 0, %s128
    $region4: #{tpu_custom_call.1} parent=1 // loop_header_branch
      %23 = sbr.rel (%p21) target = $region8
    $region5: #{tpu_custom_call.1} parent=1 // loop_body
      %s25 = ssub.s32 %s20, 1
      %s26 = ssub.s32 %s20, 2
      %s27 = sadd.s32 %s20, 1
      %s28 = ssub.s32 %s20, %s27
      %p29 = scmp.eq.s32.totalorder %s28, 0
      %s31 = sadd.s32 %s30, 1
      %s32 = scalar_select %p29, %s30, %s31
      %p35 = pneg %p29
      %p36 = scmp.eq.s32.totalorder %s20, 1
      %p37 = por %p35, %p36
      %p38 = scmp.ne.s32.totalorder %s30, %s33
      %p39 = scmp.eq.s32.totalorder %s20, 0
      %p40 = por %p38, %p39
      %p41 = scmp.ne.s32.totalorder %s30, %s33
      %p42 = scmp.eq.s32.totalorder %s25, 1
      %p43 = por %p41, %p42
      %p44 = scmp.ne.s32.totalorder %s33, %s34
      %p45 = scmp.eq.s32.totalorder %s25, 0
      %p46 = por %p44, %p45
      %p47 = scmp.ne.s32.totalorder %s33, %s34
      %p48 = scmp.eq.s32.totalorder %s26, 1
      %p49 = por %p47, %p48
      %p51 = scmp.ne.s32.totalorder %s34, %s50
      %p52 = scmp.eq.s32.totalorder %s26, 0
      %p53 = por %p51, %p52
      %s54 = ssub.s32 %s20, %s27
      %p55 = scmp.eq.s32.totalorder %s54, 0
      %s57 = sadd.s32 %s56, 1
      %s58 = scalar_select %p55, %s56, %s57
      %p61 = pneg %p55
      %p62 = scmp.eq.s32.totalorder %s20, 1
      %p63 = por %p61, %p62
      %p64 = scmp.ne.s32.totalorder %s56, %s59
      %p65 = scmp.eq.s32.totalorder %s20, 0
      %p66 = por %p64, %p65
      %p67 = scmp.ne.s32.totalorder %s56, %s59
      %p68 = scmp.eq.s32.totalorder %s25, 1
      %p69 = por %p67, %p68
      %p70 = scmp.ne.s32.totalorder %s59, %s60
      %p71 = scmp.eq.s32.totalorder %s25, 0
      %p72 = por %p70, %p71
      %p73 = scmp.ne.s32.totalorder %s59, %s60
      %p74 = scmp.eq.s32.totalorder %s26, 1
      %p75 = por %p73, %p74
      %p77 = scmp.ne.s32.totalorder %s60, %s76
      %p78 = scmp.eq.s32.totalorder %s26, 0
      %p79 = por %p77, %p78
      %s81 = sadd.s32 %s80, 1
      %p84 = scmp.eq.s32.totalorder %s20, 1
      %p85 = scmp.ne.s32.totalorder %s80, %s82
      %p86 = scmp.eq.s32.totalorder %s20, 0
      %p87 = por %p85, %p86
      %p88 = scmp.ne.s32.totalorder %s80, %s82
      %p89 = scmp.eq.s32.totalorder %s25, 1
      %p90 = por %p88, %p89
      %p91 = scmp.ne.s32.totalorder %s82, %s83
      %p92 = scmp.eq.s32.totalorder %s25, 0
      %p93 = por %p91, %p92
      %p94 = scmp.ne.s32.totalorder %s82, %s83
      %p95 = scmp.eq.s32.totalorder %s26, 1
      %p96 = por %p94, %p95
      %p98 = scmp.ne.s32.totalorder %s83, %s97
      %p99 = scmp.eq.s32.totalorder %s26, 0
      %p100 = por %p98, %p99
      %s102 = sadd.s32 %s101, 1
      %p105 = scmp.eq.s32.totalorder %s20, 1
      %p106 = scmp.ne.s32.totalorder %s101, %s103
      %p107 = scmp.eq.s32.totalorder %s20, 0
      %p108 = por %p106, %p107
      %p109 = scmp.ne.s32.totalorder %s101, %s103
      %p110 = scmp.eq.s32.totalorder %s25, 1
      %p111 = por %p109, %p110
      %p112 = scmp.ne.s32.totalorder %s103, %s104
      %p113 = scmp.eq.s32.totalorder %s25, 0
      %p114 = por %p112, %p113
      %p115 = scmp.ne.s32.totalorder %s103, %s104
      %p116 = scmp.eq.s32.totalorder %s26, 1
      %p117 = por %p115, %p116
      %p119 = scmp.ne.s32.totalorder %s104, %s118
      %p120 = scmp.eq.s32.totalorder %s26, 0
      %p121 = por %p119, %p120
      %s122 = ssub.s32 %s20, %s27
      %p123 = scmp.eq.s32.totalorder %s122, 0
      %s125 = sadd.s32 %s124, 1
      %s126 = scalar_select %p123, %s124, %s125
      %p129 = pneg %p123
      %p130 = scmp.eq.s32.totalorder %s20, 1
      %p131 = por %p129, %p130
      %p132 = scmp.ne.s32.totalorder %s124, %s127
      %p133 = scmp.eq.s32.totalorder %s20, 0
      %p134 = por %p132, %p133
      %p135 = scmp.ne.s32.totalorder %s124, %s127
      %p136 = scmp.eq.s32.totalorder %s25, 1
      %p137 = por %p135, %p136
      %p138 = scmp.ne.s32.totalorder %s127, %s128
      %p139 = scmp.eq.s32.totalorder %s25, 0
      %p140 = por %p138, %p139
      %p141 = scmp.ne.s32.totalorder %s127, %s128
      %p142 = scmp.eq.s32.totalorder %s26, 1
      %p143 = por %p141, %p142
      %p145 = scmp.ne.s32.totalorder %s128, %s144
      %p146 = scmp.eq.s32.totalorder %s26, 0
      %p147 = por %p145, %p146
      %p148 = scmp.le.s32.totalorder 1, %s20
      %p149 = scmp.lt.s32.totalorder %s20, 3
      %p150 = pnand %p148, %p149
      %p151 = pneg %p150
      // Predicated region
      $region9: #{tpu_custom_call.1} parent=5 // pred_check
        _
      $region10: #{tpu_custom_call.1} parent=5 // pred_check_branch
        %153 = sbr.rel (%p150) target = $region12
      $region11: #{tpu_custom_call.1} parent=5 // pred_region
        %s154 = ssub.s32 %s20, 1
        // Predicated region
        $region13: #{tpu_custom_call.1} parent=11 // pred_check
          %p155 = pneg %p93
        $region14: #{tpu_custom_call.1} parent=11 // pred_check_branch
          %157 = sbr.rel (%p155) target = $region16
        $region15: #{tpu_custom_call.1} parent=11 // pred_region
          %s159 = ssub.s32 6144, 6144
          %160 = vsyncadd [#allocation6], %s159
          %s161 = sshll.u32 [#allocation7], 4
          %s162 = int_to_ptr.vmem [resolvable:$true] %s161
          %167 = dma.hbm_to_vmem [thread:$0]  %s2, 6144, %s162, [#allocation6], 64, 64, 4
        $region16: #{tpu_custom_call.1} parent=11 // pred_fallthru
          _
        // Predicated region
        $region17: #{tpu_custom_call.1} parent=11 // pred_check
          %p168 = pneg %p114
        $region18: #{tpu_custom_call.1} parent=11 // pred_check_branch
          %170 = sbr.rel (%p168) target = $region20
        $region19: #{tpu_custom_call.1} parent=11 // pred_region
          %s172 = ssub.s32 96, 96
          %173 = vsyncadd [#allocation9], %s172
          %s174 = sshll.u32 [#allocation8], 4
          %s175 = int_to_ptr.vmem [resolvable:$true] %s174
          %180 = dma.hbm_to_vmem [thread:$0]  %s3, 96, %s175, [#allocation9], 16, 16, 1
        $region20: #{tpu_custom_call.1} parent=11 // pred_fallthru
          _
      $region12: #{tpu_custom_call.1} parent=5 // pred_fallthru
        _
      %p181 = scmp.lt.s32.totalorder %s20, 2
      // Predicated region
      $region21: #{tpu_custom_call.1} parent=5 // pred_check
        %p182 = pneg %p181
      $region22: #{tpu_custom_call.1} parent=5 // pred_check_branch
        %184 = sbr.rel (%p182) target = $region24
      $region23: #{tpu_custom_call.1} parent=5 // pred_region
        // Predicated region
        $region25: #{tpu_custom_call.1} parent=23 // pred_check
          %p185 = pneg %p40
        $region26: #{tpu_custom_call.1} parent=23 // pred_check_branch
          %187 = sbr.rel (%p185) target = $region28
        $region27: #{tpu_custom_call.1} parent=23 // pred_region
          %s188 = sand.u32 %s30, 1
          %s189 = scalar_lea.sflag [#allocation3], %s188
          %s190 = sand.u32 %s30, 1
          %s191 = smul.addr %s190, 256
          %s192 = scalar_lea.vmem [#allocation2], %s191
          %s193 = smul.u32 32, %s20
          %s195 = ssub.s32 4096, 4096
          %196 = vsyncadd %s189, %s195
          %s197 = smul.addr %s193, 128
          %s198 = scalar_lea.hbm %s0, %s197
          %s199 = sshll.u32 %s192, 4
          %s200 = int_to_ptr.vmem [resolvable:$true] %s199
          %205 = dma.hbm_to_vmem [thread:$0]  %s198, 4096, %s200, %s189, 128, 128, 8
        $region28: #{tpu_custom_call.1} parent=23 // pred_fallthru
          _
        // Predicated region
        $region29: #{tpu_custom_call.1} parent=23 // pred_check
          %p206 = pneg %p66
        $region30: #{tpu_custom_call.1} parent=23 // pred_check_branch
          %208 = sbr.rel (%p206) target = $region32
        $region31: #{tpu_custom_call.1} parent=23 // pred_region
          %s209 = sand.u32 %s20, 1
          %s210 = scalar_lea.sflag [#allocation6], %s209
          %s211 = sand.u32 %s56, 1
          %s212 = smul.addr %s211, 256
          %s213 = scalar_lea.vmem [#allocation5], %s212
          %s214 = smul.u32 32, %s20
          %s216 = ssub.s32 4096, 4096
          %217 = vsyncadd %s210, %s216
          %s218 = smul.addr %s214, 128
          %s219 = scalar_lea.hbm %s1, %s218
          %s220 = sshll.u32 %s213, 4
          %s221 = int_to_ptr.vmem [resolvable:$true] %s220
          %226 = dma.hbm_to_vmem [thread:$0]  %s219, 4096, %s221, %s210, 128, 128, 8
        $region32: #{tpu_custom_call.1} parent=23 // pred_fallthru
          _
      $region24: #{tpu_custom_call.1} parent=5 // pred_fallthru
        _
      %p227 = scmp.le.s32.totalorder 1, %s20
      %p228 = scmp.lt.s32.totalorder %s20, 3
      %p229 = pnand %p227, %p228
      %p230 = pneg %p229
      // Predicated region
      $region33: #{tpu_custom_call.1} parent=5 // pred_check
        _
      $region34: #{tpu_custom_call.1} parent=5 // pred_check_branch
        %232 = sbr.rel (%p229) target = $region36
      $region35: #{tpu_custom_call.1} parent=5 // pred_region
        %s233 = ssub.s32 %s20, 1
        %s234 = sand.u32 %s33, 1
        %s235 = scalar_lea.sflag [#allocation3], %s234
        %s236 = sand.u32 %s33, 1
        %s237 = smul.addr %s236, 256
        %s238 = scalar_lea.vmem [#allocation2], %s237
        // Predicated region
        $region37: #{tpu_custom_call.1} parent=35 // pred_check
          %p239 = pneg %p46
        $region38: #{tpu_custom_call.1} parent=35 // pred_check_branch
          %241 = sbr.rel (%p239) target = $region40
        $region39: #{tpu_custom_call.1} parent=35 // pred_region
          %242 = dma.done %s235, 4096
        $region40: #{tpu_custom_call.1} parent=35 // pred_fallthru
          _
        %s243 = sand.u32 %s25, 1
        %s244 = scalar_lea.sflag [#allocation6], %s243
        %s245 = sand.u32 %s59, 1
        %s246 = smul.addr %s245, 256
        %s247 = scalar_lea.vmem [#allocation5], %s246
        // Predicated region
        $region41: #{tpu_custom_call.1} parent=35 // pred_check
          %p248 = pneg %p72
        $region42: #{tpu_custom_call.1} parent=35 // pred_check_branch
          %250 = sbr.rel (%p248) target = $region44
        $region43: #{tpu_custom_call.1} parent=35 // pred_region
          %251 = dma.done %s244, 4096
        $region44: #{tpu_custom_call.1} parent=35 // pred_fallthru
          _
        // Predicated region
        $region45: #{tpu_custom_call.1} parent=35 // pred_check
          %p252 = pneg %p93
        $region46: #{tpu_custom_call.1} parent=35 // pred_check_branch
          %254 = sbr.rel (%p252) target = $region48
        $region47: #{tpu_custom_call.1} parent=35 // pred_region
          %255 = dma.done [#allocation6], 6144
        $region48: #{tpu_custom_call.1} parent=35 // pred_fallthru
          _
        // Predicated region
        $region49: #{tpu_custom_call.1} parent=35 // pred_check
          %p256 = pneg %p114
        $region50: #{tpu_custom_call.1} parent=35 // pred_check_branch
          %258 = sbr.rel (%p256) target = $region52
        $region51: #{tpu_custom_call.1} parent=35 // pred_region
          %259 = dma.done [#allocation9], 96
        $region52: #{tpu_custom_call.1} parent=35 // pred_fallthru
          _
        %s260 = sand.u32 %s33, 1
        %s261 = scalar_lea.sflag [#allocation3], %s260
        %s262 = sand.u32 %s33, 1
        %s263 = smul.addr %s262, 256
        %s264 = scalar_lea.vmem [#allocation2], %s263
        %p265 = pneg %p46
        %p266 = pneg %p43
        %s267 = sand.u32 %s25, 1
        %s268 = scalar_lea.sflag [#allocation6], %s267
        %s269 = sand.u32 %s59, 1
        %s270 = smul.addr %s269, 256
        %s271 = scalar_lea.vmem [#allocation5], %s270
        %p272 = pneg %p72
        %p273 = pneg %p69
        %p274 = pneg %p93
        %p275 = pneg %p90
        %p276 = pneg %p114
        %p277 = pneg %p111
        %p278 = pneg %p140
        %p279 = pneg %p137
        %s280 = sand.u32 %s127, 1
        %s281 = scalar_lea.sflag [#allocation4], %s280
        %s282 = sand.u32 %s127, 1
        %s283 = smul.addr %s282, 256
        %s284 = scalar_lea.vmem [#allocation10], %s283
        %s285 = smul.u32 32, %s25
        %s286 = smul.u32 32, %s25
        %s287 = smul.u32 32, %s25
        %v289 = vld [vmem:[%s238] sm:$0xff]
        %v290 = vld [vmem:[%s238 + $0x8] sm:$0xff]
        %v291 = vld [vmem:[%s238 + $0x10] sm:$0xff]
        %v292 = vld [vmem:[%s238 + $0x18] sm:$0xff]
        %v293 = vld [vmem:[%s238 + $0x20] sm:$0xff]
        %v294 = vld [vmem:[%s238 + $0x28] sm:$0xff]
        %v295 = vld [vmem:[%s238 + $0x30] sm:$0xff]
        %v296 = vld [vmem:[%s238 + $0x38] sm:$0xff]
        %v297 = vld [vmem:[%s238 + $0x40] sm:$0xff]
        %v298 = vld [vmem:[%s238 + $0x48] sm:$0xff]
        %v299 = vld [vmem:[%s238 + $0x50] sm:$0xff]
        %v300 = vld [vmem:[%s238 + $0x58] sm:$0xff]
        %v301 = vld [vmem:[%s238 + $0x60] sm:$0xff]
        %v302 = vld [vmem:[%s238 + $0x68] sm:$0xff]
        %v303 = vld [vmem:[%s238 + $0x70] sm:$0xff]
        %v304 = vld [vmem:[%s238 + $0x78] sm:$0xff]
        %v305 = vld [vmem:[%s238 + $0x80] sm:$0xff]
        %v306 = vld [vmem:[%s238 + $0x88] sm:$0xff]
        %v307 = vld [vmem:[%s238 + $0x90] sm:$0xff]
        %v308 = vld [vmem:[%s238 + $0x98] sm:$0xff]
        %v309 = vld [vmem:[%s238 + $0xa0] sm:$0xff]
        %v310 = vld [vmem:[%s238 + $0xa8] sm:$0xff]
        %v311 = vld [vmem:[%s238 + $0xb0] sm:$0xff]
        %v312 = vld [vmem:[%s238 + $0xb8] sm:$0xff]
        %v313 = vld [vmem:[%s238 + $0xc0] sm:$0xff]
        %v314 = vld [vmem:[%s238 + $0xc8] sm:$0xff]
        %v315 = vld [vmem:[%s238 + $0xd0] sm:$0xff]
        %v316 = vld [vmem:[%s238 + $0xd8] sm:$0xff]
        %v317 = vld [vmem:[%s238 + $0xe0] sm:$0xff]
        %v318 = vld [vmem:[%s238 + $0xe8] sm:$0xff]
        %v319 = vld [vmem:[%s238 + $0xf0] sm:$0xff]
        %v320 = vld [vmem:[%s238 + $0xf8] sm:$0xff]
        %v321 = vpack.c.bf16 %v290, %v289
        %v322 = vpack.c.bf16 %v292, %v291
        %v323 = vpack.c.bf16 %v294, %v293
        %v324 = vpack.c.bf16 %v296, %v295
        %v325 = vpack.c.bf16 %v298, %v297
        %v326 = vpack.c.bf16 %v300, %v299
        %v327 = vpack.c.bf16 %v302, %v301
        %v328 = vpack.c.bf16 %v304, %v303
        %v329 = vpack.c.bf16 %v306, %v305
        %v330 = vpack.c.bf16 %v308, %v307
        %v331 = vpack.c.bf16 %v310, %v309
        %v332 = vpack.c.bf16 %v312, %v311
        %v333 = vpack.c.bf16 %v314, %v313
        %v334 = vpack.c.bf16 %v316, %v315
        %v335 = vpack.c.bf16 %v318, %v317
        %v336 = vpack.c.bf16 %v320, %v319
        %v337 = vld [vmem:[#allocation7] sm:$0xf]
        %v338 = vld [vmem:[#allocation7 + $0x4] sm:$0xf]
        %v339 = vld [vmem:[#allocation7 + $0x8] sm:$0xf]
        %v340 = vld [vmem:[#allocation7 + $0xc] sm:$0xf]
        %v341 = vld [vmem:[#allocation7 + $0x10] sm:$0xf]
        %v342 = vld [vmem:[#allocation7 + $0x14] sm:$0xf]
        %v343 = vld [vmem:[#allocation7 + $0x18] sm:$0xf]
        %v344 = vld [vmem:[#allocation7 + $0x1c] sm:$0xf]
        %v345 = vld [vmem:[#allocation7 + $0x20] sm:$0xf]
        %v346 = vld [vmem:[#allocation7 + $0x24] sm:$0xf]
        %v347 = vld [vmem:[#allocation7 + $0x28] sm:$0xf]
        %v348 = vld [vmem:[#allocation7 + $0x2c] sm:$0xf]
        %v349 = vld [vmem:[#allocation7 + $0x30] sm:$0xf]
        %v350 = vld [vmem:[#allocation7 + $0x34] sm:$0xf]
        %v351 = vld [vmem:[#allocation7 + $0x38] sm:$0xf]
        %v352 = vld [vmem:[#allocation7 + $0x3c] sm:$0xf]
        %v353 = vld [vmem:[#allocation8] sm:$0x1]
        %v355 = vlaneseq
        %v356 = vshrl.u32 %v355, 7
        %v357 = vsub.s32 0, %v356
        %v358 = vrot.slane %v353, %v357
        %v376 = vunpack.c.l.b16 %v337
        %v377 = vunpack.c.l.b16 %v338
        %v378 = vunpack.c.l.b16 %v339
        %v379 = vunpack.c.l.b16 %v340
        %v380 = vunpack.c.l.b16 %v341
        %v381 = vunpack.c.l.b16 %v342
        %v382 = vunpack.c.l.b16 %v343
        %v383 = vunpack.c.l.b16 %v344
        %v384 = vunpack.c.l.b16 %v345
        %v385 = vunpack.c.l.b16 %v346
        %v386 = vunpack.c.l.b16 %v347
        %v387 = vunpack.c.l.b16 %v348
        %v388 = vunpack.c.l.b16 %v349
        %v389 = vunpack.c.l.b16 %v350
        %v390 = vunpack.c.l.b16 %v351
        %v391 = vunpack.c.l.b16 %v352
        %v392 = vpack.c.b16 %v377, %v376
        %v393 = vpack.c.b16 %v379, %v378
        %v394 = vpack.c.b16 %v381, %v380
        %v395 = vpack.c.b16 %v383, %v382
        %v396 = vpack.c.b16 %v385, %v384
        %v397 = vpack.c.b16 %v387, %v386
        %v398 = vpack.c.b16 %v389, %v388
        %v399 = vpack.c.b16 %v391, %v390
        %408 = vmatprep.subr.bf16.mxu0 0
        %409 = vmatpush1.bf16.msra.mxu0 %v399
        %410 = vmatprep.subr.bf16.mxu0 0
        %411 = vmatpush1.bf16.msra.mxu0 %v398
        %412 = vmatprep.subr.bf16.mxu0 0
        %413 = vmatpush1.bf16.msra.mxu0 %v397
        %414 = vmatprep.subr.bf16.mxu0 0
        %415 = vmatpush1.bf16.msra.mxu0 %v396
        %416 = vmatprep.subr.bf16.mxu0 0
        %417 = vmatpush1.bf16.msra.mxu0 %v395
        %418 = vmatprep.subr.bf16.mxu0 0
        %419 = vmatpush1.bf16.msra.mxu0 %v394
        %420 = vmatprep.subr.bf16.mxu0 0
        %421 = vmatpush1.bf16.msra.mxu0 %v393
        %422 = vmatprep.subr.bf16.mxu0 0
        %423 = vmatpush1.bf16.msra.mxu0 %v392
        %424 = vmatprep.subr.bf16.mxu0 0
        %425 = vmatpush2.bf16.msra.mxu0 0
        %426 = vmatprep.subr.bf16.mxu0 0
        %427 = vmatpush2.bf16.msra.mxu0 0
        %428 = vmatprep.subr.bf16.mxu0 0
        %429 = vmatpush2.bf16.msra.mxu0 0
        %430 = vmatprep.subr.bf16.mxu0 0
        %431 = vmatpush2.bf16.msra.mxu0 0
        %432 = vmatprep.subr.bf16.mxu0 0
        %433 = vmatpush2.bf16.msra.mxu0 0
        %434 = vmatprep.subr.bf16.mxu0 0
        %435 = vmatpush2.bf16.msra.mxu0 0
        %436 = vmatprep.subr.bf16.mxu0 0
        %437 = vmatpush2.bf16.msra.mxu0 0
        %438 = vmatprep.subr.bf16.mxu0 0
        %439 = vmatpush2.bf16.msra.mxu0 0
        %440 = vmatprep.mubr.bf16.mxu0 0
        %441 = vmatmul.mubr.bf16.gmra.mxu0 %v321
        %v442 = vpop.f32.mrf.mxu0
        %v443 = vadd.f32 %v358, %v442
        %v444 = vpop.f32.mrf.mxu0
        %v445 = vpop.f32.mrf.mxu0
        %v446 = vadd.f32 %v358, %v445
        %v447 = vpop.f32.mrf.mxu0
        %448 = vmatprep.mubr.bf16.mxu0 0
        %449 = vmatmul.mubr.bf16.gmra.mxu0 %v322
        %v450 = vpop.f32.mrf.mxu0
        %v451 = vadd.f32 %v358, %v450
        %v452 = vpop.f32.mrf.mxu0
        %v453 = vpop.f32.mrf.mxu0
        %v454 = vadd.f32 %v358, %v453
        %v455 = vpop.f32.mrf.mxu0
        %456 = vmatprep.mubr.bf16.mxu0 0
        %457 = vmatmul.mubr.bf16.gmra.mxu0 %v323
        %v458 = vpop.f32.mrf.mxu0
        %v459 = vadd.f32 %v358, %v458
        %v460 = vpop.f32.mrf.mxu0
        %v461 = vpop.f32.mrf.mxu0
        %v462 = vadd.f32 %v358, %v461
        %v463 = vpop.f32.mrf.mxu0
        %464 = vmatprep.mubr.bf16.mxu0 0
        %465 = vmatmul.mubr.bf16.gmra.mxu0 %v324
        %v466 = vpop.f32.mrf.mxu0
        %v467 = vadd.f32 %v358, %v466
        %v468 = vpop.f32.mrf.mxu0
        %v469 = vpop.f32.mrf.mxu0
        %v470 = vadd.f32 %v358, %v469
        %v471 = vpop.f32.mrf.mxu0
        %472 = vmatprep.mubr.bf16.mxu0 0
        %473 = vmatmul.mubr.bf16.gmra.mxu0 %v325
        %v474 = vpop.f32.mrf.mxu0
        %v475 = vadd.f32 %v358, %v474
        %v476 = vpop.f32.mrf.mxu0
        %v477 = vpop.f32.mrf.mxu0
        %v478 = vadd.f32 %v358, %v477
        %v479 = vpop.f32.mrf.mxu0
        %480 = vmatprep.mubr.bf16.mxu0 0
        %481 = vmatmul.mubr.bf16.gmra.mxu0 %v326
        %v482 = vpop.f32.mrf.mxu0
        %v483 = vadd.f32 %v358, %v482
        %v484 = vpop.f32.mrf.mxu0
        %v485 = vpop.f32.mrf.mxu0
        %v486 = vadd.f32 %v358, %v485
        %v487 = vpop.f32.mrf.mxu0
        %488 = vmatprep.mubr.bf16.mxu0 0
        %489 = vmatmul.mubr.bf16.gmra.mxu0 %v327
        %v490 = vpop.f32.mrf.mxu0
        %v491 = vadd.f32 %v358, %v490
        %v492 = vpop.f32.mrf.mxu0
        %v493 = vpop.f32.mrf.mxu0
        %v494 = vadd.f32 %v358, %v493
        %v495 = vpop.f32.mrf.mxu0
        %496 = vmatprep.mubr.bf16.mxu0 0
        %497 = vmatmul.mubr.bf16.gmra.mxu0 %v328
        %v498 = vpop.f32.mrf.mxu0
        %v499 = vadd.f32 %v358, %v498
        %v500 = vpop.f32.mrf.mxu0
        %v501 = vpop.f32.mrf.mxu0
        %v502 = vadd.f32 %v358, %v501
        %v503 = vpop.f32.mrf.mxu0
        %504 = vmatprep.mubr.bf16.mxu0 0
        %505 = vmatmul.mubr.bf16.gmra.mxu0 %v329
        %v506 = vpop.f32.mrf.mxu0
        %v507 = vadd.f32 %v358, %v506
        %v508 = vpop.f32.mrf.mxu0
        %v509 = vpop.f32.mrf.mxu0
        %v510 = vadd.f32 %v358, %v509
        %v511 = vpop.f32.mrf.mxu0
        %512 = vmatprep.mubr.bf16.mxu0 0
        %513 = vmatmul.mubr.bf16.gmra.mxu0 %v330
        %v514 = vpop.f32.mrf.mxu0
        %v515 = vadd.f32 %v358, %v514
        %v516 = vpop.f32.mrf.mxu0
        %v517 = vpop.f32.mrf.mxu0
        %v518 = vadd.f32 %v358, %v517
        %v519 = vpop.f32.mrf.mxu0
        %520 = vmatprep.mubr.bf16.mxu0 0
        %521 = vmatmul.mubr.bf16.gmra.mxu0 %v331
        %v522 = vpop.f32.mrf.mxu0
        %v523 = vadd.f32 %v358, %v522
        %v524 = vpop.f32.mrf.mxu0
        %v525 = vpop.f32.mrf.mxu0
        %v526 = vadd.f32 %v358, %v525
        %v527 = vpop.f32.mrf.mxu0
        %528 = vmatprep.mubr.bf16.mxu0 0
        %529 = vmatmul.mubr.bf16.gmra.mxu0 %v332
        %v530 = vpop.f32.mrf.mxu0
        %v531 = vadd.f32 %v358, %v530
        %v532 = vpop.f32.mrf.mxu0
        %v533 = vpop.f32.mrf.mxu0
        %v534 = vadd.f32 %v358, %v533
        %v535 = vpop.f32.mrf.mxu0
        %536 = vmatprep.mubr.bf16.mxu0 0
        %537 = vmatmul.mubr.bf16.gmra.mxu0 %v333
        %v538 = vpop.f32.mrf.mxu0
        %v539 = vadd.f32 %v358, %v538
        %v540 = vpop.f32.mrf.mxu0
        %v541 = vpop.f32.mrf.mxu0
        %v542 = vadd.f32 %v358, %v541
        %v543 = vpop.f32.mrf.mxu0
        %544 = vmatprep.mubr.bf16.mxu0 0
        %545 = vmatmul.mubr.bf16.gmra.mxu0 %v334
        %v546 = vpop.f32.mrf.mxu0
        %v547 = vadd.f32 %v358, %v546
        %v548 = vpop.f32.mrf.mxu0
        %v549 = vpop.f32.mrf.mxu0
        %v550 = vadd.f32 %v358, %v549
        %v551 = vpop.f32.mrf.mxu0
        %552 = vmatprep.mubr.bf16.mxu0 0
        %553 = vmatmul.mubr.bf16.gmra.mxu0 %v335
        %v554 = vpop.f32.mrf.mxu0
        %v555 = vadd.f32 %v358, %v554
        %v556 = vpop.f32.mrf.mxu0
        %v557 = vpop.f32.mrf.mxu0
        %v558 = vadd.f32 %v358, %v557
        %v559 = vpop.f32.mrf.mxu0
        %560 = vmatprep.mubr.bf16.mxu0 0
        %561 = vmatmul.mubr.bf16.gmra.mxu0 %v336
        %v562 = vpop.f32.mrf.mxu0
        %v563 = vadd.f32 %v358, %v562
        %v564 = vpop.f32.mrf.mxu0
        %v565 = vpop.f32.mrf.mxu0
        %v566 = vadd.f32 %v358, %v565
        %v567 = vpop.f32.mrf.mxu0
        %568 = vdwg.mxu0
        %v569 = vmax.f32 %v443, 0.0
        %v570 = vmax.f32 %v446, 0.0
        %v571 = vmax.f32 %v451, 0.0
        %v572 = vmax.f32 %v454, 0.0
        %v573 = vmax.f32 %v459, 0.0
        %v574 = vmax.f32 %v462, 0.0
        %v575 = vmax.f32 %v467, 0.0
        %v576 = vmax.f32 %v470, 0.0
        %v577 = vmax.f32 %v475, 0.0
        %v578 = vmax.f32 %v478, 0.0
        %v579 = vmax.f32 %v483, 0.0
        %v580 = vmax.f32 %v486, 0.0
        %v581 = vmax.f32 %v491, 0.0
        %v582 = vmax.f32 %v494, 0.0
        %v583 = vmax.f32 %v499, 0.0
        %v584 = vmax.f32 %v502, 0.0
        %v585 = vmax.f32 %v507, 0.0
        %v586 = vmax.f32 %v510, 0.0
        %v587 = vmax.f32 %v515, 0.0
        %v588 = vmax.f32 %v518, 0.0
        %v589 = vmax.f32 %v523, 0.0
        %v590 = vmax.f32 %v526, 0.0
        %v591 = vmax.f32 %v531, 0.0
        %v592 = vmax.f32 %v534, 0.0
        %v593 = vmax.f32 %v539, 0.0
        %v594 = vmax.f32 %v542, 0.0
        %v595 = vmax.f32 %v547, 0.0
        %v596 = vmax.f32 %v550, 0.0
        %v597 = vmax.f32 %v555, 0.0
        %v598 = vmax.f32 %v558, 0.0
        %v599 = vmax.f32 %v563, 0.0
        %v600 = vmax.f32 %v566, 0.0
        %v601 = vpack.c.bf16 %v570, %v569
        %v602 = vpack.c.bf16 %v572, %v571
        %v603 = vpack.c.bf16 %v574, %v573
        %v604 = vpack.c.bf16 %v576, %v575
        %v605 = vpack.c.bf16 %v578, %v577
        %v606 = vpack.c.bf16 %v580, %v579
        %v607 = vpack.c.bf16 %v582, %v581
        %v608 = vpack.c.bf16 %v584, %v583
        %v609 = vpack.c.bf16 %v586, %v585
        %v610 = vpack.c.bf16 %v588, %v587
        %v611 = vpack.c.bf16 %v590, %v589
        %v612 = vpack.c.bf16 %v592, %v591
        %v613 = vpack.c.bf16 %v594, %v593
        %v614 = vpack.c.bf16 %v596, %v595
        %v615 = vpack.c.bf16 %v598, %v597
        %v616 = vpack.c.bf16 %v600, %v599
        %s617 = scalar_lea.vmem [#allocation7], 64
        %v618 = vld [vmem:[%s617] sm:$0xf]
        %v619 = vld [vmem:[%s617 + $0x4] sm:$0xf]
        %v620 = vld [vmem:[%s617 + $0x8] sm:$0xf]
        %v621 = vld [vmem:[%s617 + $0xc] sm:$0xf]
        %v622 = vld [vmem:[%s617 + $0x10] sm:$0xf]
        %v623 = vld [vmem:[%s617 + $0x14] sm:$0xf]
        %v624 = vld [vmem:[%s617 + $0x18] sm:$0xf]
        %v625 = vld [vmem:[%s617 + $0x1c] sm:$0xf]
        %v626 = vld [vmem:[%s617 + $0x20] sm:$0xf]
        %v627 = vld [vmem:[%s617 + $0x24] sm:$0xf]
        %v628 = vld [vmem:[%s617 + $0x28] sm:$0xf]
        %v629 = vld [vmem:[%s617 + $0x2c] sm:$0xf]
        %v630 = vld [vmem:[%s617 + $0x30] sm:$0xf]
        %v631 = vld [vmem:[%s617 + $0x34] sm:$0xf]
        %v632 = vld [vmem:[%s617 + $0x38] sm:$0xf]
        %v633 = vld [vmem:[%s617 + $0x3c] sm:$0xf]
        %s634 = scalar_lea.vmem [#allocation8], 1
        %v635 = vld [vmem:[%s634] sm:$0x1]
        %v637 = vlaneseq
        %v638 = vshrl.u32 %v637, 7
        %v639 = vsub.s32 0, %v638
        %v640 = vrot.slane %v635, %v639
        %v658 = vunpack.c.l.b16 %v618
        %v659 = vunpack.c.l.b16 %v619
        %v660 = vunpack.c.l.b16 %v620
        %v661 = vunpack.c.l.b16 %v621
        %v662 = vunpack.c.l.b16 %v622
        %v663 = vunpack.c.l.b16 %v623
        %v664 = vunpack.c.l.b16 %v624
        %v665 = vunpack.c.l.b16 %v625
        %v666 = vunpack.c.l.b16 %v626
        %v667 = vunpack.c.l.b16 %v627
        %v668 = vunpack.c.l.b16 %v628
        %v669 = vunpack.c.l.b16 %v629
        %v670 = vunpack.c.l.b16 %v630
        %v671 = vunpack.c.l.b16 %v631
        %v672 = vunpack.c.l.b16 %v632
        %v673 = vunpack.c.l.b16 %v633
        %v674 = vpack.c.b16 %v659, %v658
        %v675 = vpack.c.b16 %v661, %v660
        %v676 = vpack.c.b16 %v663, %v662
        %v677 = vpack.c.b16 %v665, %v664
        %v678 = vpack.c.b16 %v667, %v666
        %v679 = vpack.c.b16 %v669, %v668
        %v680 = vpack.c.b16 %v671, %v670
        %v681 = vpack.c.b16 %v673, %v672
        %690 = vmatprep.subr.bf16.mxu0 0
        %691 = vmatpush1.bf16.msra.mxu0 %v681
        %692 = vmatprep.subr.bf16.mxu0 0
        %693 = vmatpush1.bf16.msra.mxu0 %v680
        %694 = vmatprep.subr.bf16.mxu0 0
        %695 = vmatpush1.bf16.msra.mxu0 %v679
        %696 = vmatprep.subr.bf16.mxu0 0
        %697 = vmatpush1.bf16.msra.mxu0 %v678
        %698 = vmatprep.subr.bf16.mxu0 0
        %699 = vmatpush1.bf16.msra.mxu0 %v677
        %700 = vmatprep.subr.bf16.mxu0 0
        %701 = vmatpush1.bf16.msra.mxu0 %v676
        %702 = vmatprep.subr.bf16.mxu0 0
        %703 = vmatpush1.bf16.msra.mxu0 %v675
        %704 = vmatprep.subr.bf16.mxu0 0
        %705 = vmatpush1.bf16.msra.mxu0 %v674
        %706 = vmatprep.subr.bf16.mxu0 0
        %707 = vmatpush2.bf16.msra.mxu0 0
        %708 = vmatprep.subr.bf16.mxu0 0
        %709 = vmatpush2.bf16.msra.mxu0 0
        %710 = vmatprep.subr.bf16.mxu0 0
        %711 = vmatpush2.bf16.msra.mxu0 0
        %712 = vmatprep.subr.bf16.mxu0 0
        %713 = vmatpush2.bf16.msra.mxu0 0
        %714 = vmatprep.subr.bf16.mxu0 0
        %715 = vmatpush2.bf16.msra.mxu0 0
        %716 = vmatprep.subr.bf16.mxu0 0
        %717 = vmatpush2.bf16.msra.mxu0 0
        %718 = vmatprep.subr.bf16.mxu0 0
        %719 = vmatpush2.bf16.msra.mxu0 0
        %720 = vmatprep.subr.bf16.mxu0 0
        %721 = vmatpush2.bf16.msra.mxu0 0
        %722 = vmatprep.mubr.bf16.mxu0 0
        %723 = vmatmul.mubr.bf16.gmra.mxu0 %v601
        %v724 = vpop.f32.mrf.mxu0
        %v725 = vadd.f32 %v640, %v724
        %v726 = vpop.f32.mrf.mxu0
        %v727 = vpop.f32.mrf.mxu0
        %v728 = vadd.f32 %v640, %v727
        %v729 = vpop.f32.mrf.mxu0
        %730 = vmatprep.mubr.bf16.mxu0 0
        %731 = vmatmul.mubr.bf16.gmra.mxu0 %v602
        %v732 = vpop.f32.mrf.mxu0
        %v733 = vadd.f32 %v640, %v732
        %v734 = vpop.f32.mrf.mxu0
        %v735 = vpop.f32.mrf.mxu0
        %v736 = vadd.f32 %v640, %v735
        %v737 = vpop.f32.mrf.mxu0
        %738 = vmatprep.mubr.bf16.mxu0 0
        %739 = vmatmul.mubr.bf16.gmra.mxu0 %v603
        %v740 = vpop.f32.mrf.mxu0
        %v741 = vadd.f32 %v640, %v740
        %v742 = vpop.f32.mrf.mxu0
        %v743 = vpop.f32.mrf.mxu0
        %v744 = vadd.f32 %v640, %v743
        %v745 = vpop.f32.mrf.mxu0
        %746 = vmatprep.mubr.bf16.mxu0 0
        %747 = vmatmul.mubr.bf16.gmra.mxu0 %v604
        %v748 = vpop.f32.mrf.mxu0
        %v749 = vadd.f32 %v640, %v748
        %v750 = vpop.f32.mrf.mxu0
        %v751 = vpop.f32.mrf.mxu0
        %v752 = vadd.f32 %v640, %v751
        %v753 = vpop.f32.mrf.mxu0
        %754 = vmatprep.mubr.bf16.mxu0 0
        %755 = vmatmul.mubr.bf16.gmra.mxu0 %v605
        %v756 = vpop.f32.mrf.mxu0
        %v757 = vadd.f32 %v640, %v756
        %v758 = vpop.f32.mrf.mxu0
        %v759 = vpop.f32.mrf.mxu0
        %v760 = vadd.f32 %v640, %v759
        %v761 = vpop.f32.mrf.mxu0
        %762 = vmatprep.mubr.bf16.mxu0 0
        %763 = vmatmul.mubr.bf16.gmra.mxu0 %v606
        %v764 = vpop.f32.mrf.mxu0
        %v765 = vadd.f32 %v640, %v764
        %v766 = vpop.f32.mrf.mxu0
        %v767 = vpop.f32.mrf.mxu0
        %v768 = vadd.f32 %v640, %v767
        %v769 = vpop.f32.mrf.mxu0
        %770 = vmatprep.mubr.bf16.mxu0 0
        %771 = vmatmul.mubr.bf16.gmra.mxu0 %v607
        %v772 = vpop.f32.mrf.mxu0
        %v773 = vadd.f32 %v640, %v772
        %v774 = vpop.f32.mrf.mxu0
        %v775 = vpop.f32.mrf.mxu0
        %v776 = vadd.f32 %v640, %v775
        %v777 = vpop.f32.mrf.mxu0
        %778 = vmatprep.mubr.bf16.mxu0 0
        %779 = vmatmul.mubr.bf16.gmra.mxu0 %v608
        %v780 = vpop.f32.mrf.mxu0
        %v781 = vadd.f32 %v640, %v780
        %v782 = vpop.f32.mrf.mxu0
        %v783 = vpop.f32.mrf.mxu0
        %v784 = vadd.f32 %v640, %v783
        %v785 = vpop.f32.mrf.mxu0
        %786 = vmatprep.mubr.bf16.mxu0 0
        %787 = vmatmul.mubr.bf16.gmra.mxu0 %v609
        %v788 = vpop.f32.mrf.mxu0
        %v789 = vadd.f32 %v640, %v788
        %v790 = vpop.f32.mrf.mxu0
        %v791 = vpop.f32.mrf.mxu0
        %v792 = vadd.f32 %v640, %v791
        %v793 = vpop.f32.mrf.mxu0
        %794 = vmatprep.mubr.bf16.mxu0 0
        %795 = vmatmul.mubr.bf16.gmra.mxu0 %v610
        %v796 = vpop.f32.mrf.mxu0
        %v797 = vadd.f32 %v640, %v796
        %v798 = vpop.f32.mrf.mxu0
        %v799 = vpop.f32.mrf.mxu0
        %v800 = vadd.f32 %v640, %v799
        %v801 = vpop.f32.mrf.mxu0
        %802 = vmatprep.mubr.bf16.mxu0 0
        %803 = vmatmul.mubr.bf16.gmra.mxu0 %v611
        %v804 = vpop.f32.mrf.mxu0
        %v805 = vadd.f32 %v640, %v804
        %v806 = vpop.f32.mrf.mxu0
        %v807 = vpop.f32.mrf.mxu0
        %v808 = vadd.f32 %v640, %v807
        %v809 = vpop.f32.mrf.mxu0
        %810 = vmatprep.mubr.bf16.mxu0 0
        %811 = vmatmul.mubr.bf16.gmra.mxu0 %v612
        %v812 = vpop.f32.mrf.mxu0
        %v813 = vadd.f32 %v640, %v812
        %v814 = vpop.f32.mrf.mxu0
        %v815 = vpop.f32.mrf.mxu0
        %v816 = vadd.f32 %v640, %v815
        %v817 = vpop.f32.mrf.mxu0
        %818 = vmatprep.mubr.bf16.mxu0 0
        %819 = vmatmul.mubr.bf16.gmra.mxu0 %v613
        %v820 = vpop.f32.mrf.mxu0
        %v821 = vadd.f32 %v640, %v820
        %v822 = vpop.f32.mrf.mxu0
        %v823 = vpop.f32.mrf.mxu0
        %v824 = vadd.f32 %v640, %v823
        %v825 = vpop.f32.mrf.mxu0
        %826 = vmatprep.mubr.bf16.mxu0 0
        %827 = vmatmul.mubr.bf16.gmra.mxu0 %v614
        %v828 = vpop.f32.mrf.mxu0
        %v829 = vadd.f32 %v640, %v828
        %v830 = vpop.f32.mrf.mxu0
        %v831 = vpop.f32.mrf.mxu0
        %v832 = vadd.f32 %v640, %v831
        %v833 = vpop.f32.mrf.mxu0
        %834 = vmatprep.mubr.bf16.mxu0 0
        %835 = vmatmul.mubr.bf16.gmra.mxu0 %v615
        %v836 = vpop.f32.mrf.mxu0
        %v837 = vadd.f32 %v640, %v836
        %v838 = vpop.f32.mrf.mxu0
        %v839 = vpop.f32.mrf.mxu0
        %v840 = vadd.f32 %v640, %v839
        %v841 = vpop.f32.mrf.mxu0
        %842 = vmatprep.mubr.bf16.mxu0 0
        %843 = vmatmul.mubr.bf16.gmra.mxu0 %v616
        %v844 = vpop.f32.mrf.mxu0
        %v845 = vadd.f32 %v640, %v844
        %v846 = vpop.f32.mrf.mxu0
        %v847 = vpop.f32.mrf.mxu0
        %v848 = vadd.f32 %v640, %v847
        %v849 = vpop.f32.mrf.mxu0
        %850 = vdwg.mxu0
        %v851 = vmax.f32 %v725, 0.0
        %v852 = vmax.f32 %v728, 0.0
        %v853 = vmax.f32 %v733, 0.0
        %v854 = vmax.f32 %v736, 0.0
        %v855 = vmax.f32 %v741, 0.0
        %v856 = vmax.f32 %v744, 0.0
        %v857 = vmax.f32 %v749, 0.0
        %v858 = vmax.f32 %v752, 0.0
        %v859 = vmax.f32 %v757, 0.0
        %v860 = vmax.f32 %v760, 0.0
        %v861 = vmax.f32 %v765, 0.0
        %v862 = vmax.f32 %v768, 0.0
        %v863 = vmax.f32 %v773, 0.0
        %v864 = vmax.f32 %v776, 0.0
        %v865 = vmax.f32 %v781, 0.0
        %v866 = vmax.f32 %v784, 0.0
        %v867 = vmax.f32 %v789, 0.0
        %v868 = vmax.f32 %v792, 0.0
        %v869 = vmax.f32 %v797, 0.0
        %v870 = vmax.f32 %v800, 0.0
        %v871 = vmax.f32 %v805, 0.0
        %v872 = vmax.f32 %v808, 0.0
        %v873 = vmax.f32 %v813, 0.0
        %v874 = vmax.f32 %v816, 0.0
        %v875 = vmax.f32 %v821, 0.0
        %v876 = vmax.f32 %v824, 0.0
        %v877 = vmax.f32 %v829, 0.0
        %v878 = vmax.f32 %v832, 0.0
        %v879 = vmax.f32 %v837, 0.0
        %v880 = vmax.f32 %v840, 0.0
        %v881 = vmax.f32 %v845, 0.0
        %v882 = vmax.f32 %v848, 0.0
        %v883 = vpack.c.bf16 %v852, %v851
        %v884 = vpack.c.bf16 %v854, %v853
        %v885 = vpack.c.bf16 %v856, %v855
        %v886 = vpack.c.bf16 %v858, %v857
        %v887 = vpack.c.bf16 %v860, %v859
        %v888 = vpack.c.bf16 %v862, %v861
        %v889 = vpack.c.bf16 %v864, %v863
        %v890 = vpack.c.bf16 %v866, %v865
        %v891 = vpack.c.bf16 %v868, %v867
        %v892 = vpack.c.bf16 %v870, %v869
        %v893 = vpack.c.bf16 %v872, %v871
        %v894 = vpack.c.bf16 %v874, %v873
        %v895 = vpack.c.bf16 %v876, %v875
        %v896 = vpack.c.bf16 %v878, %v877
        %v897 = vpack.c.bf16 %v880, %v879
        %v898 = vpack.c.bf16 %v882, %v881
        %s899 = scalar_lea.vmem [#allocation7], 128
        %v900 = vld [vmem:[%s899] sm:$0xf]
        %v901 = vld [vmem:[%s899 + $0x4] sm:$0xf]
        %v902 = vld [vmem:[%s899 + $0x8] sm:$0xf]
        %v903 = vld [vmem:[%s899 + $0xc] sm:$0xf]
        %v904 = vld [vmem:[%s899 + $0x10] sm:$0xf]
        %v905 = vld [vmem:[%s899 + $0x14] sm:$0xf]
        %v906 = vld [vmem:[%s899 + $0x18] sm:$0xf]
        %v907 = vld [vmem:[%s899 + $0x1c] sm:$0xf]
        %v908 = vld [vmem:[%s899 + $0x20] sm:$0xf]
        %v909 = vld [vmem:[%s899 + $0x24] sm:$0xf]
        %v910 = vld [vmem:[%s899 + $0x28] sm:$0xf]
        %v911 = vld [vmem:[%s899 + $0x2c] sm:$0xf]
        %v912 = vld [vmem:[%s899 + $0x30] sm:$0xf]
        %v913 = vld [vmem:[%s899 + $0x34] sm:$0xf]
        %v914 = vld [vmem:[%s899 + $0x38] sm:$0xf]
        %v915 = vld [vmem:[%s899 + $0x3c] sm:$0xf]
        %s916 = scalar_lea.vmem [#allocation8], 2
        %v917 = vld [vmem:[%s916] sm:$0x1]
        %v919 = vlaneseq
        %v920 = vshrl.u32 %v919, 7
        %v921 = vsub.s32 0, %v920
        %v922 = vrot.slane %v917, %v921
        %v940 = vunpack.c.l.b16 %v900
        %v941 = vunpack.c.l.b16 %v901
        %v942 = vunpack.c.l.b16 %v902
        %v943 = vunpack.c.l.b16 %v903
        %v944 = vunpack.c.l.b16 %v904
        %v945 = vunpack.c.l.b16 %v905
        %v946 = vunpack.c.l.b16 %v906
        %v947 = vunpack.c.l.b16 %v907
        %v948 = vunpack.c.l.b16 %v908
        %v949 = vunpack.c.l.b16 %v909
        %v950 = vunpack.c.l.b16 %v910
        %v951 = vunpack.c.l.b16 %v911
        %v952 = vunpack.c.l.b16 %v912
        %v953 = vunpack.c.l.b16 %v913
        %v954 = vunpack.c.l.b16 %v914
        %v955 = vunpack.c.l.b16 %v915
        %v956 = vpack.c.b16 %v941, %v940
        %v957 = vpack.c.b16 %v943, %v942
        %v958 = vpack.c.b16 %v945, %v944
        %v959 = vpack.c.b16 %v947, %v946
        %v960 = vpack.c.b16 %v949, %v948
        %v961 = vpack.c.b16 %v951, %v950
        %v962 = vpack.c.b16 %v953, %v952
        %v963 = vpack.c.b16 %v955, %v954
        %972 = vmatprep.subr.bf16.mxu0 0
        %973 = vmatpush1.bf16.msra.mxu0 %v963
        %974 = vmatprep.subr.bf16.mxu0 0
        %975 = vmatpush1.bf16.msra.mxu0 %v962
        %976 = vmatprep.subr.bf16.mxu0 0
        %977 = vmatpush1.bf16.msra.mxu0 %v961
        %978 = vmatprep.subr.bf16.mxu0 0
        %979 = vmatpush1.bf16.msra.mxu0 %v960
        %980 = vmatprep.subr.bf16.mxu0 0
        %981 = vmatpush1.bf16.msra.mxu0 %v959
        %982 = vmatprep.subr.bf16.mxu0 0
        %983 = vmatpush1.bf16.msra.mxu0 %v958
        %984 = vmatprep.subr.bf16.mxu0 0
        %985 = vmatpush1.bf16.msra.mxu0 %v957
        %986 = vmatprep.subr.bf16.mxu0 0
        %987 = vmatpush1.bf16.msra.mxu0 %v956
        %988 = vmatprep.subr.bf16.mxu0 0
        %989 = vmatpush2.bf16.msra.mxu0 0
        %990 = vmatprep.subr.bf16.mxu0 0
        %991 = vmatpush2.bf16.msra.mxu0 0
        %992 = vmatprep.subr.bf16.mxu0 0
        %993 = vmatpush2.bf16.msra.mxu0 0
        %994 = vmatprep.subr.bf16.mxu0 0
        %995 = vmatpush2.bf16.msra.mxu0 0
        %996 = vmatprep.subr.bf16.mxu0 0
        %997 = vmatpush2.bf16.msra.mxu0 0
        %998 = vmatprep.subr.bf16.mxu0 0
        %999 = vmatpush2.bf16.msra.mxu0 0
        %1000 = vmatprep.subr.bf16.mxu0 0
        %1001 = vmatpush2.bf16.msra.mxu0 0
        %1002 = vmatprep.subr.bf16.mxu0 0
        %1003 = vmatpush2.bf16.msra.mxu0 0
        %1004 = vmatprep.mubr.bf16.mxu0 0
        %1005 = vmatmul.mubr.bf16.gmra.mxu0 %v883
        %v1006 = vpop.f32.mrf.mxu0
        %v1007 = vadd.f32 %v922, %v1006
        %v1008 = vpop.f32.mrf.mxu0
        %v1009 = vpop.f32.mrf.mxu0
        %v1010 = vadd.f32 %v922, %v1009
        %v1011 = vpop.f32.mrf.mxu0
        %1012 = vmatprep.mubr.bf16.mxu0 0
        %1013 = vmatmul.mubr.bf16.gmra.mxu0 %v884
        %v1014 = vpop.f32.mrf.mxu0
        %v1015 = vadd.f32 %v922, %v1014
        %v1016 = vpop.f32.mrf.mxu0
        %v1017 = vpop.f32.mrf.mxu0
        %v1018 = vadd.f32 %v922, %v1017
        %v1019 = vpop.f32.mrf.mxu0
        %1020 = vmatprep.mubr.bf16.mxu0 0
        %1021 = vmatmul.mubr.bf16.gmra.mxu0 %v885
        %v1022 = vpop.f32.mrf.mxu0
        %v1023 = vadd.f32 %v922, %v1022
        %v1024 = vpop.f32.mrf.mxu0
        %v1025 = vpop.f32.mrf.mxu0
        %v1026 = vadd.f32 %v922, %v1025
        %v1027 = vpop.f32.mrf.mxu0
        %1028 = vmatprep.mubr.bf16.mxu0 0
        %1029 = vmatmul.mubr.bf16.gmra.mxu0 %v886
        %v1030 = vpop.f32.mrf.mxu0
        %v1031 = vadd.f32 %v922, %v1030
        %v1032 = vpop.f32.mrf.mxu0
        %v1033 = vpop.f32.mrf.mxu0
        %v1034 = vadd.f32 %v922, %v1033
        %v1035 = vpop.f32.mrf.mxu0
        %1036 = vmatprep.mubr.bf16.mxu0 0
        %1037 = vmatmul.mubr.bf16.gmra.mxu0 %v887
        %v1038 = vpop.f32.mrf.mxu0
        %v1039 = vadd.f32 %v922, %v1038
        %v1040 = vpop.f32.mrf.mxu0
        %v1041 = vpop.f32.mrf.mxu0
        %v1042 = vadd.f32 %v922, %v1041
        %v1043 = vpop.f32.mrf.mxu0
        %1044 = vmatprep.mubr.bf16.mxu0 0
        %1045 = vmatmul.mubr.bf16.gmra.mxu0 %v888
        %v1046 = vpop.f32.mrf.mxu0
        %v1047 = vadd.f32 %v922, %v1046
        %v1048 = vpop.f32.mrf.mxu0
        %v1049 = vpop.f32.mrf.mxu0
        %v1050 = vadd.f32 %v922, %v1049
        %v1051 = vpop.f32.mrf.mxu0
        %1052 = vmatprep.mubr.bf16.mxu0 0
        %1053 = vmatmul.mubr.bf16.gmra.mxu0 %v889
        %v1054 = vpop.f32.mrf.mxu0
        %v1055 = vadd.f32 %v922, %v1054
        %v1056 = vpop.f32.mrf.mxu0
        %v1057 = vpop.f32.mrf.mxu0
        %v1058 = vadd.f32 %v922, %v1057
        %v1059 = vpop.f32.mrf.mxu0
        %1060 = vmatprep.mubr.bf16.mxu0 0
        %1061 = vmatmul.mubr.bf16.gmra.mxu0 %v890
        %v1062 = vpop.f32.mrf.mxu0
        %v1063 = vadd.f32 %v922, %v1062
        %v1064 = vpop.f32.mrf.mxu0
        %v1065 = vpop.f32.mrf.mxu0
        %v1066 = vadd.f32 %v922, %v1065
        %v1067 = vpop.f32.mrf.mxu0
        %1068 = vmatprep.mubr.bf16.mxu0 0
        %1069 = vmatmul.mubr.bf16.gmra.mxu0 %v891
        %v1070 = vpop.f32.mrf.mxu0
        %v1071 = vadd.f32 %v922, %v1070
        %v1072 = vpop.f32.mrf.mxu0
        %v1073 = vpop.f32.mrf.mxu0
        %v1074 = vadd.f32 %v922, %v1073
        %v1075 = vpop.f32.mrf.mxu0
        %1076 = vmatprep.mubr.bf16.mxu0 0
        %1077 = vmatmul.mubr.bf16.gmra.mxu0 %v892
        %v1078 = vpop.f32.mrf.mxu0
        %v1079 = vadd.f32 %v922, %v1078
        %v1080 = vpop.f32.mrf.mxu0
        %v1081 = vpop.f32.mrf.mxu0
        %v1082 = vadd.f32 %v922, %v1081
        %v1083 = vpop.f32.mrf.mxu0
        %1084 = vmatprep.mubr.bf16.mxu0 0
        %1085 = vmatmul.mubr.bf16.gmra.mxu0 %v893
        %v1086 = vpop.f32.mrf.mxu0
        %v1087 = vadd.f32 %v922, %v1086
        %v1088 = vpop.f32.mrf.mxu0
        %v1089 = vpop.f32.mrf.mxu0
        %v1090 = vadd.f32 %v922, %v1089
        %v1091 = vpop.f32.mrf.mxu0
        %1092 = vmatprep.mubr.bf16.mxu0 0
        %1093 = vmatmul.mubr.bf16.gmra.mxu0 %v894
        %v1094 = vpop.f32.mrf.mxu0
        %v1095 = vadd.f32 %v922, %v1094
        %v1096 = vpop.f32.mrf.mxu0
        %v1097 = vpop.f32.mrf.mxu0
        %v1098 = vadd.f32 %v922, %v1097
        %v1099 = vpop.f32.mrf.mxu0
        %1100 = vmatprep.mubr.bf16.mxu0 0
        %1101 = vmatmul.mubr.bf16.gmra.mxu0 %v895
        %v1102 = vpop.f32.mrf.mxu0
        %v1103 = vadd.f32 %v922, %v1102
        %v1104 = vpop.f32.mrf.mxu0
        %v1105 = vpop.f32.mrf.mxu0
        %v1106 = vadd.f32 %v922, %v1105
        %v1107 = vpop.f32.mrf.mxu0
        %1108 = vmatprep.mubr.bf16.mxu0 0
        %1109 = vmatmul.mubr.bf16.gmra.mxu0 %v896
        %v1110 = vpop.f32.mrf.mxu0
        %v1111 = vadd.f32 %v922, %v1110
        %v1112 = vpop.f32.mrf.mxu0
        %v1113 = vpop.f32.mrf.mxu0
        %v1114 = vadd.f32 %v922, %v1113
        %v1115 = vpop.f32.mrf.mxu0
        %1116 = vmatprep.mubr.bf16.mxu0 0
        %1117 = vmatmul.mubr.bf16.gmra.mxu0 %v897
        %v1118 = vpop.f32.mrf.mxu0
        %v1119 = vadd.f32 %v922, %v1118
        %v1120 = vpop.f32.mrf.mxu0
        %v1121 = vpop.f32.mrf.mxu0
        %v1122 = vadd.f32 %v922, %v1121
        %v1123 = vpop.f32.mrf.mxu0
        %1124 = vmatprep.mubr.bf16.mxu0 0
        %1125 = vmatmul.mubr.bf16.gmra.mxu0 %v898
        %v1126 = vpop.f32.mrf.mxu0
        %v1127 = vadd.f32 %v922, %v1126
        %v1128 = vpop.f32.mrf.mxu0
        %v1129 = vpop.f32.mrf.mxu0
        %v1130 = vadd.f32 %v922, %v1129
        %v1131 = vpop.f32.mrf.mxu0
        %1132 = vdwg.mxu0
        %v1133 = vadd.f32 %v569, %v1007
        %v1134 = vadd.f32 %v570, %v1010
        %v1135 = vadd.f32 %v571, %v1015
        %v1136 = vadd.f32 %v572, %v1018
        %v1137 = vadd.f32 %v573, %v1023
        %v1138 = vadd.f32 %v574, %v1026
        %v1139 = vadd.f32 %v575, %v1031
        %v1140 = vadd.f32 %v576, %v1034
        %v1141 = vadd.f32 %v577, %v1039
        %v1142 = vadd.f32 %v578, %v1042
        %v1143 = vadd.f32 %v579, %v1047
        %v1144 = vadd.f32 %v580, %v1050
        %v1145 = vadd.f32 %v581, %v1055
        %v1146 = vadd.f32 %v582, %v1058
        %v1147 = vadd.f32 %v583, %v1063
        %v1148 = vadd.f32 %v584, %v1066
        %v1149 = vadd.f32 %v585, %v1071
        %v1150 = vadd.f32 %v586, %v1074
        %v1151 = vadd.f32 %v587, %v1079
        %v1152 = vadd.f32 %v588, %v1082
        %v1153 = vadd.f32 %v589, %v1087
        %v1154 = vadd.f32 %v590, %v1090
        %v1155 = vadd.f32 %v591, %v1095
        %v1156 = vadd.f32 %v592, %v1098
        %v1157 = vadd.f32 %v593, %v1103
        %v1158 = vadd.f32 %v594, %v1106
        %v1159 = vadd.f32 %v595, %v1111
        %v1160 = vadd.f32 %v596, %v1114
        %v1161 = vadd.f32 %v597, %v1119
        %v1162 = vadd.f32 %v598, %v1122
        %v1163 = vadd.f32 %v599, %v1127
        %v1164 = vadd.f32 %v600, %v1130
        %v1165 = vmax.f32 %v1133, 0.0
        %v1166 = vmax.f32 %v1134, 0.0
        %v1167 = vmax.f32 %v1135, 0.0
        %v1168 = vmax.f32 %v1136, 0.0
        %v1169 = vmax.f32 %v1137, 0.0
        %v1170 = vmax.f32 %v1138, 0.0
        %v1171 = vmax.f32 %v1139, 0.0
        %v1172 = vmax.f32 %v1140, 0.0
        %v1173 = vmax.f32 %v1141, 0.0
        %v1174 = vmax.f32 %v1142, 0.0
        %v1175 = vmax.f32 %v1143, 0.0
        %v1176 = vmax.f32 %v1144, 0.0
        %v1177 = vmax.f32 %v1145, 0.0
        %v1178 = vmax.f32 %v1146, 0.0
        %v1179 = vmax.f32 %v1147, 0.0
        %v1180 = vmax.f32 %v1148, 0.0
        %v1181 = vmax.f32 %v1149, 0.0
        %v1182 = vmax.f32 %v1150, 0.0
        %v1183 = vmax.f32 %v1151, 0.0
        %v1184 = vmax.f32 %v1152, 0.0
        %v1185 = vmax.f32 %v1153, 0.0
        %v1186 = vmax.f32 %v1154, 0.0
        %v1187 = vmax.f32 %v1155, 0.0
        %v1188 = vmax.f32 %v1156, 0.0
        %v1189 = vmax.f32 %v1157, 0.0
        %v1190 = vmax.f32 %v1158, 0.0
        %v1191 = vmax.f32 %v1159, 0.0
        %v1192 = vmax.f32 %v1160, 0.0
        %v1193 = vmax.f32 %v1161, 0.0
        %v1194 = vmax.f32 %v1162, 0.0
        %v1195 = vmax.f32 %v1163, 0.0
        %v1196 = vmax.f32 %v1164, 0.0
        %v1197 = vpack.c.bf16 %v1166, %v1165
        %v1198 = vpack.c.bf16 %v1168, %v1167
        %v1199 = vpack.c.bf16 %v1170, %v1169
        %v1200 = vpack.c.bf16 %v1172, %v1171
        %v1201 = vpack.c.bf16 %v1174, %v1173
        %v1202 = vpack.c.bf16 %v1176, %v1175
        %v1203 = vpack.c.bf16 %v1178, %v1177
        %v1204 = vpack.c.bf16 %v1180, %v1179
        %v1205 = vpack.c.bf16 %v1182, %v1181
        %v1206 = vpack.c.bf16 %v1184, %v1183
        %v1207 = vpack.c.bf16 %v1186, %v1185
        %v1208 = vpack.c.bf16 %v1188, %v1187
        %v1209 = vpack.c.bf16 %v1190, %v1189
        %v1210 = vpack.c.bf16 %v1192, %v1191
        %v1211 = vpack.c.bf16 %v1194, %v1193
        %v1212 = vpack.c.bf16 %v1196, %v1195
        %s1213 = scalar_lea.vmem [#allocation7], 192
        %v1214 = vld [vmem:[%s1213] sm:$0xf]
        %v1215 = vld [vmem:[%s1213 + $0x4] sm:$0xf]
        %v1216 = vld [vmem:[%s1213 + $0x8] sm:$0xf]
        %v1217 = vld [vmem:[%s1213 + $0xc] sm:$0xf]
        %v1218 = vld [vmem:[%s1213 + $0x10] sm:$0xf]
        %v1219 = vld [vmem:[%s1213 + $0x14] sm:$0xf]
        %v1220 = vld [vmem:[%s1213 + $0x18] sm:$0xf]
        %v1221 = vld [vmem:[%s1213 + $0x1c] sm:$0xf]
        %v1222 = vld [vmem:[%s1213 + $0x20] sm:$0xf]
        %v1223 = vld [vmem:[%s1213 + $0x24] sm:$0xf]
        %v1224 = vld [vmem:[%s1213 + $0x28] sm:$0xf]
        %v1225 = vld [vmem:[%s1213 + $0x2c] sm:$0xf]
        %v1226 = vld [vmem:[%s1213 + $0x30] sm:$0xf]
        %v1227 = vld [vmem:[%s1213 + $0x34] sm:$0xf]
        %v1228 = vld [vmem:[%s1213 + $0x38] sm:$0xf]
        %v1229 = vld [vmem:[%s1213 + $0x3c] sm:$0xf]
        %s1230 = scalar_lea.vmem [#allocation8], 3
        %v1231 = vld [vmem:[%s1230] sm:$0x1]
        %v1233 = vlaneseq
        %v1234 = vshrl.u32 %v1233, 7
        %v1235 = vsub.s32 0, %v1234
        %v1236 = vrot.slane %v1231, %v1235
        %v1254 = vunpack.c.l.b16 %v1214
        %v1255 = vunpack.c.l.b16 %v1215
        %v1256 = vunpack.c.l.b16 %v1216
        %v1257 = vunpack.c.l.b16 %v1217
        %v1258 = vunpack.c.l.b16 %v1218
        %v1259 = vunpack.c.l.b16 %v1219
        %v1260 = vunpack.c.l.b16 %v1220
        %v1261 = vunpack.c.l.b16 %v1221
        %v1262 = vunpack.c.l.b16 %v1222
        %v1263 = vunpack.c.l.b16 %v1223
        %v1264 = vunpack.c.l.b16 %v1224
        %v1265 = vunpack.c.l.b16 %v1225
        %v1266 = vunpack.c.l.b16 %v1226
        %v1267 = vunpack.c.l.b16 %v1227
        %v1268 = vunpack.c.l.b16 %v1228
        %v1269 = vunpack.c.l.b16 %v1229
        %v1270 = vpack.c.b16 %v1255, %v1254
        %v1271 = vpack.c.b16 %v1257, %v1256
        %v1272 = vpack.c.b16 %v1259, %v1258
        %v1273 = vpack.c.b16 %v1261, %v1260
        %v1274 = vpack.c.b16 %v1263, %v1262
        %v1275 = vpack.c.b16 %v1265, %v1264
        %v1276 = vpack.c.b16 %v1267, %v1266
        %v1277 = vpack.c.b16 %v1269, %v1268
        %1286 = vmatprep.subr.bf16.mxu0 0
        %1287 = vmatpush1.bf16.msra.mxu0 %v1277
        %1288 = vmatprep.subr.bf16.mxu0 0
        %1289 = vmatpush1.bf16.msra.mxu0 %v1276
        %1290 = vmatprep.subr.bf16.mxu0 0
        %1291 = vmatpush1.bf16.msra.mxu0 %v1275
        %1292 = vmatprep.subr.bf16.mxu0 0
        %1293 = vmatpush1.bf16.msra.mxu0 %v1274
        %1294 = vmatprep.subr.bf16.mxu0 0
        %1295 = vmatpush1.bf16.msra.mxu0 %v1273
        %1296 = vmatprep.subr.bf16.mxu0 0
        %1297 = vmatpush1.bf16.msra.mxu0 %v1272
        %1298 = vmatprep.subr.bf16.mxu0 0
        %1299 = vmatpush1.bf16.msra.mxu0 %v1271
        %1300 = vmatprep.subr.bf16.mxu0 0
        %1301 = vmatpush1.bf16.msra.mxu0 %v1270
        %1302 = vmatprep.subr.bf16.mxu0 0
        %1303 = vmatpush2.bf16.msra.mxu0 0
        %1304 = vmatprep.subr.bf16.mxu0 0
        %1305 = vmatpush2.bf16.msra.mxu0 0
        %1306 = vmatprep.subr.bf16.mxu0 0
        %1307 = vmatpush2.bf16.msra.mxu0 0
        %1308 = vmatprep.subr.bf16.mxu0 0
        %1309 = vmatpush2.bf16.msra.mxu0 0
        %1310 = vmatprep.subr.bf16.mxu0 0
        %1311 = vmatpush2.bf16.msra.mxu0 0
        %1312 = vmatprep.subr.bf16.mxu0 0
        %1313 = vmatpush2.bf16.msra.mxu0 0
        %1314 = vmatprep.subr.bf16.mxu0 0
        %1315 = vmatpush2.bf16.msra.mxu0 0
        %1316 = vmatprep.subr.bf16.mxu0 0
        %1317 = vmatpush2.bf16.msra.mxu0 0
        %1318 = vmatprep.mubr.bf16.mxu0 0
        %1319 = vmatmul.mubr.bf16.gmra.mxu0 %v1197
        %v1320 = vpop.f32.mrf.mxu0
        %v1321 = vadd.f32 %v1236, %v1320
        %v1322 = vpop.f32.mrf.mxu0
        %v1323 = vpop.f32.mrf.mxu0
        %v1324 = vadd.f32 %v1236, %v1323
        %v1325 = vpop.f32.mrf.mxu0
        %1326 = vmatprep.mubr.bf16.mxu0 0
        %1327 = vmatmul.mubr.bf16.gmra.mxu0 %v1198
        %v1328 = vpop.f32.mrf.mxu0
        %v1329 = vadd.f32 %v1236, %v1328
        %v1330 = vpop.f32.mrf.mxu0
        %v1331 = vpop.f32.mrf.mxu0
        %v1332 = vadd.f32 %v1236, %v1331
        %v1333 = vpop.f32.mrf.mxu0
        %1334 = vmatprep.mubr.bf16.mxu0 0
        %1335 = vmatmul.mubr.bf16.gmra.mxu0 %v1199
        %v1336 = vpop.f32.mrf.mxu0
        %v1337 = vadd.f32 %v1236, %v1336
        %v1338 = vpop.f32.mrf.mxu0
        %v1339 = vpop.f32.mrf.mxu0
        %v1340 = vadd.f32 %v1236, %v1339
        %v1341 = vpop.f32.mrf.mxu0
        %1342 = vmatprep.mubr.bf16.mxu0 0
        %1343 = vmatmul.mubr.bf16.gmra.mxu0 %v1200
        %v1344 = vpop.f32.mrf.mxu0
        %v1345 = vadd.f32 %v1236, %v1344
        %v1346 = vpop.f32.mrf.mxu0
        %v1347 = vpop.f32.mrf.mxu0
        %v1348 = vadd.f32 %v1236, %v1347
        %v1349 = vpop.f32.mrf.mxu0
        %1350 = vmatprep.mubr.bf16.mxu0 0
        %1351 = vmatmul.mubr.bf16.gmra.mxu0 %v1201
        %v1352 = vpop.f32.mrf.mxu0
        %v1353 = vadd.f32 %v1236, %v1352
        %v1354 = vpop.f32.mrf.mxu0
        %v1355 = vpop.f32.mrf.mxu0
        %v1356 = vadd.f32 %v1236, %v1355
        %v1357 = vpop.f32.mrf.mxu0
        %1358 = vmatprep.mubr.bf16.mxu0 0
        %1359 = vmatmul.mubr.bf16.gmra.mxu0 %v1202
        %v1360 = vpop.f32.mrf.mxu0
        %v1361 = vadd.f32 %v1236, %v1360
        %v1362 = vpop.f32.mrf.mxu0
        %v1363 = vpop.f32.mrf.mxu0
        %v1364 = vadd.f32 %v1236, %v1363
        %v1365 = vpop.f32.mrf.mxu0
        %1366 = vmatprep.mubr.bf16.mxu0 0
        %1367 = vmatmul.mubr.bf16.gmra.mxu0 %v1203
        %v1368 = vpop.f32.mrf.mxu0
        %v1369 = vadd.f32 %v1236, %v1368
        %v1370 = vpop.f32.mrf.mxu0
        %v1371 = vpop.f32.mrf.mxu0
        %v1372 = vadd.f32 %v1236, %v1371
        %v1373 = vpop.f32.mrf.mxu0
        %1374 = vmatprep.mubr.bf16.mxu0 0
        %1375 = vmatmul.mubr.bf16.gmra.mxu0 %v1204
        %v1376 = vpop.f32.mrf.mxu0
        %v1377 = vadd.f32 %v1236, %v1376
        %v1378 = vpop.f32.mrf.mxu0
        %v1379 = vpop.f32.mrf.mxu0
        %v1380 = vadd.f32 %v1236, %v1379
        %v1381 = vpop.f32.mrf.mxu0
        %1382 = vmatprep.mubr.bf16.mxu0 0
        %1383 = vmatmul.mubr.bf16.gmra.mxu0 %v1205
        %v1384 = vpop.f32.mrf.mxu0
        %v1385 = vadd.f32 %v1236, %v1384
        %v1386 = vpop.f32.mrf.mxu0
        %v1387 = vpop.f32.mrf.mxu0
        %v1388 = vadd.f32 %v1236, %v1387
        %v1389 = vpop.f32.mrf.mxu0
        %1390 = vmatprep.mubr.bf16.mxu0 0
        %1391 = vmatmul.mubr.bf16.gmra.mxu0 %v1206
        %v1392 = vpop.f32.mrf.mxu0
        %v1393 = vadd.f32 %v1236, %v1392
        %v1394 = vpop.f32.mrf.mxu0
        %v1395 = vpop.f32.mrf.mxu0
        %v1396 = vadd.f32 %v1236, %v1395
        %v1397 = vpop.f32.mrf.mxu0
        %1398 = vmatprep.mubr.bf16.mxu0 0
        %1399 = vmatmul.mubr.bf16.gmra.mxu0 %v1207
        %v1400 = vpop.f32.mrf.mxu0
        %v1401 = vadd.f32 %v1236, %v1400
        %v1402 = vpop.f32.mrf.mxu0
        %v1403 = vpop.f32.mrf.mxu0
        %v1404 = vadd.f32 %v1236, %v1403
        %v1405 = vpop.f32.mrf.mxu0
        %1406 = vmatprep.mubr.bf16.mxu0 0
        %1407 = vmatmul.mubr.bf16.gmra.mxu0 %v1208
        %v1408 = vpop.f32.mrf.mxu0
        %v1409 = vadd.f32 %v1236, %v1408
        %v1410 = vpop.f32.mrf.mxu0
        %v1411 = vpop.f32.mrf.mxu0
        %v1412 = vadd.f32 %v1236, %v1411
        %v1413 = vpop.f32.mrf.mxu0
        %1414 = vmatprep.mubr.bf16.mxu0 0
        %1415 = vmatmul.mubr.bf16.gmra.mxu0 %v1209
        %v1416 = vpop.f32.mrf.mxu0
        %v1417 = vadd.f32 %v1236, %v1416
        %v1418 = vpop.f32.mrf.mxu0
        %v1419 = vpop.f32.mrf.mxu0
        %v1420 = vadd.f32 %v1236, %v1419
        %v1421 = vpop.f32.mrf.mxu0
        %1422 = vmatprep.mubr.bf16.mxu0 0
        %1423 = vmatmul.mubr.bf16.gmra.mxu0 %v1210
        %v1424 = vpop.f32.mrf.mxu0
        %v1425 = vadd.f32 %v1236, %v1424
        %v1426 = vpop.f32.mrf.mxu0
        %v1427 = vpop.f32.mrf.mxu0
        %v1428 = vadd.f32 %v1236, %v1427
        %v1429 = vpop.f32.mrf.mxu0
        %1430 = vmatprep.mubr.bf16.mxu0 0
        %1431 = vmatmul.mubr.bf16.gmra.mxu0 %v1211
        %v1432 = vpop.f32.mrf.mxu0
        %v1433 = vadd.f32 %v1236, %v1432
        %v1434 = vpop.f32.mrf.mxu0
        %v1435 = vpop.f32.mrf.mxu0
        %v1436 = vadd.f32 %v1236, %v1435
        %v1437 = vpop.f32.mrf.mxu0
        %1438 = vmatprep.mubr.bf16.mxu0 0
        %1439 = vmatmul.mubr.bf16.gmra.mxu0 %v1212
        %v1440 = vpop.f32.mrf.mxu0
        %v1441 = vadd.f32 %v1236, %v1440
        %v1442 = vpop.f32.mrf.mxu0
        %v1443 = vpop.f32.mrf.mxu0
        %v1444 = vadd.f32 %v1236, %v1443
        %v1445 = vpop.f32.mrf.mxu0
        %1446 = vdwg.mxu0
        %v1447 = vmax.f32 %v1321, 0.0
        %v1448 = vmax.f32 %v1324, 0.0
        %v1449 = vmax.f32 %v1329, 0.0
        %v1450 = vmax.f32 %v1332, 0.0
        %v1451 = vmax.f32 %v1337, 0.0
        %v1452 = vmax.f32 %v1340, 0.0
        %v1453 = vmax.f32 %v1345, 0.0
        %v1454 = vmax.f32 %v1348, 0.0
        %v1455 = vmax.f32 %v1353, 0.0
        %v1456 = vmax.f32 %v1356, 0.0
        %v1457 = vmax.f32 %v1361, 0.0
        %v1458 = vmax.f32 %v1364, 0.0
        %v1459 = vmax.f32 %v1369, 0.0
        %v1460 = vmax.f32 %v1372, 0.0
        %v1461 = vmax.f32 %v1377, 0.0
        %v1462 = vmax.f32 %v1380, 0.0
        %v1463 = vmax.f32 %v1385, 0.0
        %v1464 = vmax.f32 %v1388, 0.0
        %v1465 = vmax.f32 %v1393, 0.0
        %v1466 = vmax.f32 %v1396, 0.0
        %v1467 = vmax.f32 %v1401, 0.0
        %v1468 = vmax.f32 %v1404, 0.0
        %v1469 = vmax.f32 %v1409, 0.0
        %v1470 = vmax.f32 %v1412, 0.0
        %v1471 = vmax.f32 %v1417, 0.0
        %v1472 = vmax.f32 %v1420, 0.0
        %v1473 = vmax.f32 %v1425, 0.0
        %v1474 = vmax.f32 %v1428, 0.0
        %v1475 = vmax.f32 %v1433, 0.0
        %v1476 = vmax.f32 %v1436, 0.0
        %v1477 = vmax.f32 %v1441, 0.0
        %v1478 = vmax.f32 %v1444, 0.0
        %v1479 = vpack.c.bf16 %v1448, %v1447
        %v1480 = vpack.c.bf16 %v1450, %v1449
        %v1481 = vpack.c.bf16 %v1452, %v1451
        %v1482 = vpack.c.bf16 %v1454, %v1453
        %v1483 = vpack.c.bf16 %v1456, %v1455
        %v1484 = vpack.c.bf16 %v1458, %v1457
        %v1485 = vpack.c.bf16 %v1460, %v1459
        %v1486 = vpack.c.bf16 %v1462, %v1461
        %v1487 = vpack.c.bf16 %v1464, %v1463
        %v1488 = vpack.c.bf16 %v1466, %v1465
        %v1489 = vpack.c.bf16 %v1468, %v1467
        %v1490 = vpack.c.bf16 %v1470, %v1469
        %v1491 = vpack.c.bf16 %v1472, %v1471
        %v1492 = vpack.c.bf16 %v1474, %v1473
        %v1493 = vpack.c.bf16 %v1476, %v1475
        %v1494 = vpack.c.bf16 %v1478, %v1477
        %s1495 = scalar_lea.vmem [#allocation7], 256
        %v1496 = vld [vmem:[%s1495] sm:$0xf]
        %v1497 = vld [vmem:[%s1495 + $0x4] sm:$0xf]
        %v1498 = vld [vmem:[%s1495 + $0x8] sm:$0xf]
        %v1499 = vld [vmem:[%s1495 + $0xc] sm:$0xf]
        %v1500 = vld [vmem:[%s1495 + $0x10] sm:$0xf]
        %v1501 = vld [vmem:[%s1495 + $0x14] sm:$0xf]
        %v1502 = vld [vmem:[%s1495 + $0x18] sm:$0xf]
        %v1503 = vld [vmem:[%s1495 + $0x1c] sm:$0xf]
        %v1504 = vld [vmem:[%s1495 + $0x20] sm:$0xf]
        %v1505 = vld [vmem:[%s1495 + $0x24] sm:$0xf]
        %v1506 = vld [vmem:[%s1495 + $0x28] sm:$0xf]
        %v1507 = vld [vmem:[%s1495 + $0x2c] sm:$0xf]
        %v1508 = vld [vmem:[%s1495 + $0x30] sm:$0xf]
        %v1509 = vld [vmem:[%s1495 + $0x34] sm:$0xf]
        %v1510 = vld [vmem:[%s1495 + $0x38] sm:$0xf]
        %v1511 = vld [vmem:[%s1495 + $0x3c] sm:$0xf]
        %s1512 = scalar_lea.vmem [#allocation8], 4
        %v1513 = vld [vmem:[%s1512] sm:$0x1]
        %v1515 = vlaneseq
        %v1516 = vshrl.u32 %v1515, 7
        %v1517 = vsub.s32 0, %v1516
        %v1518 = vrot.slane %v1513, %v1517
        %v1536 = vunpack.c.l.b16 %v1496
        %v1537 = vunpack.c.l.b16 %v1497
        %v1538 = vunpack.c.l.b16 %v1498
        %v1539 = vunpack.c.l.b16 %v1499
        %v1540 = vunpack.c.l.b16 %v1500
        %v1541 = vunpack.c.l.b16 %v1501
        %v1542 = vunpack.c.l.b16 %v1502
        %v1543 = vunpack.c.l.b16 %v1503
        %v1544 = vunpack.c.l.b16 %v1504
        %v1545 = vunpack.c.l.b16 %v1505
        %v1546 = vunpack.c.l.b16 %v1506
        %v1547 = vunpack.c.l.b16 %v1507
        %v1548 = vunpack.c.l.b16 %v1508
        %v1549 = vunpack.c.l.b16 %v1509
        %v1550 = vunpack.c.l.b16 %v1510
        %v1551 = vunpack.c.l.b16 %v1511
        %v1552 = vpack.c.b16 %v1537, %v1536
        %v1553 = vpack.c.b16 %v1539, %v1538
        %v1554 = vpack.c.b16 %v1541, %v1540
        %v1555 = vpack.c.b16 %v1543, %v1542
        %v1556 = vpack.c.b16 %v1545, %v1544
        %v1557 = vpack.c.b16 %v1547, %v1546
        %v1558 = vpack.c.b16 %v1549, %v1548
        %v1559 = vpack.c.b16 %v1551, %v1550
        %1568 = vmatprep.subr.bf16.mxu0 0
        %1569 = vmatpush1.bf16.msra.mxu0 %v1559
        %1570 = vmatprep.subr.bf16.mxu0 0
        %1571 = vmatpush1.bf16.msra.mxu0 %v1558
        %1572 = vmatprep.subr.bf16.mxu0 0
        %1573 = vmatpush1.bf16.msra.mxu0 %v1557
        %1574 = vmatprep.subr.bf16.mxu0 0
        %1575 = vmatpush1.bf16.msra.mxu0 %v1556
        %1576 = vmatprep.subr.bf16.mxu0 0
        %1577 = vmatpush1.bf16.msra.mxu0 %v1555
        %1578 = vmatprep.subr.bf16.mxu0 0
        %1579 = vmatpush1.bf16.msra.mxu0 %v1554
        %1580 = vmatprep.subr.bf16.mxu0 0
        %1581 = vmatpush1.bf16.msra.mxu0 %v1553
        %1582 = vmatprep.subr.bf16.mxu0 0
        %1583 = vmatpush1.bf16.msra.mxu0 %v1552
        %1584 = vmatprep.subr.bf16.mxu0 0
        %1585 = vmatpush2.bf16.msra.mxu0 0
        %1586 = vmatprep.subr.bf16.mxu0 0
        %1587 = vmatpush2.bf16.msra.mxu0 0
        %1588 = vmatprep.subr.bf16.mxu0 0
        %1589 = vmatpush2.bf16.msra.mxu0 0
        %1590 = vmatprep.subr.bf16.mxu0 0
        %1591 = vmatpush2.bf16.msra.mxu0 0
        %1592 = vmatprep.subr.bf16.mxu0 0
        %1593 = vmatpush2.bf16.msra.mxu0 0
        %1594 = vmatprep.subr.bf16.mxu0 0
        %1595 = vmatpush2.bf16.msra.mxu0 0
        %1596 = vmatprep.subr.bf16.mxu0 0
        %1597 = vmatpush2.bf16.msra.mxu0 0
        %1598 = vmatprep.subr.bf16.mxu0 0
        %1599 = vmatpush2.bf16.msra.mxu0 0
        %1600 = vmatprep.mubr.bf16.mxu0 0
        %1601 = vmatmul.mubr.bf16.gmra.mxu0 %v1479
        %v1602 = vpop.f32.mrf.mxu0
        %v1603 = vadd.f32 %v1518, %v1602
        %v1604 = vpop.f32.mrf.mxu0
        %v1605 = vpop.f32.mrf.mxu0
        %v1606 = vadd.f32 %v1518, %v1605
        %v1607 = vpop.f32.mrf.mxu0
        %1608 = vmatprep.mubr.bf16.mxu0 0
        %1609 = vmatmul.mubr.bf16.gmra.mxu0 %v1480
        %v1610 = vpop.f32.mrf.mxu0
        %v1611 = vadd.f32 %v1518, %v1610
        %v1612 = vpop.f32.mrf.mxu0
        %v1613 = vpop.f32.mrf.mxu0
        %v1614 = vadd.f32 %v1518, %v1613
        %v1615 = vpop.f32.mrf.mxu0
        %1616 = vmatprep.mubr.bf16.mxu0 0
        %1617 = vmatmul.mubr.bf16.gmra.mxu0 %v1481
        %v1618 = vpop.f32.mrf.mxu0
        %v1619 = vadd.f32 %v1518, %v1618
        %v1620 = vpop.f32.mrf.mxu0
        %v1621 = vpop.f32.mrf.mxu0
        %v1622 = vadd.f32 %v1518, %v1621
        %v1623 = vpop.f32.mrf.mxu0
        %1624 = vmatprep.mubr.bf16.mxu0 0
        %1625 = vmatmul.mubr.bf16.gmra.mxu0 %v1482
        %v1626 = vpop.f32.mrf.mxu0
        %v1627 = vadd.f32 %v1518, %v1626
        %v1628 = vpop.f32.mrf.mxu0
        %v1629 = vpop.f32.mrf.mxu0
        %v1630 = vadd.f32 %v1518, %v1629
        %v1631 = vpop.f32.mrf.mxu0
        %1632 = vmatprep.mubr.bf16.mxu0 0
        %1633 = vmatmul.mubr.bf16.gmra.mxu0 %v1483
        %v1634 = vpop.f32.mrf.mxu0
        %v1635 = vadd.f32 %v1518, %v1634
        %v1636 = vpop.f32.mrf.mxu0
        %v1637 = vpop.f32.mrf.mxu0
        %v1638 = vadd.f32 %v1518, %v1637
        %v1639 = vpop.f32.mrf.mxu0
        %1640 = vmatprep.mubr.bf16.mxu0 0
        %1641 = vmatmul.mubr.bf16.gmra.mxu0 %v1484
        %v1642 = vpop.f32.mrf.mxu0
        %v1643 = vadd.f32 %v1518, %v1642
        %v1644 = vpop.f32.mrf.mxu0
        %v1645 = vpop.f32.mrf.mxu0
        %v1646 = vadd.f32 %v1518, %v1645
        %v1647 = vpop.f32.mrf.mxu0
        %1648 = vmatprep.mubr.bf16.mxu0 0
        %1649 = vmatmul.mubr.bf16.gmra.mxu0 %v1485
        %v1650 = vpop.f32.mrf.mxu0
        %v1651 = vadd.f32 %v1518, %v1650
        %v1652 = vpop.f32.mrf.mxu0
        %v1653 = vpop.f32.mrf.mxu0
        %v1654 = vadd.f32 %v1518, %v1653
        %v1655 = vpop.f32.mrf.mxu0
        %1656 = vmatprep.mubr.bf16.mxu0 0
        %1657 = vmatmul.mubr.bf16.gmra.mxu0 %v1486
        %v1658 = vpop.f32.mrf.mxu0
        %v1659 = vadd.f32 %v1518, %v1658
        %v1660 = vpop.f32.mrf.mxu0
        %v1661 = vpop.f32.mrf.mxu0
        %v1662 = vadd.f32 %v1518, %v1661
        %v1663 = vpop.f32.mrf.mxu0
        %1664 = vmatprep.mubr.bf16.mxu0 0
        %1665 = vmatmul.mubr.bf16.gmra.mxu0 %v1487
        %v1666 = vpop.f32.mrf.mxu0
        %v1667 = vadd.f32 %v1518, %v1666
        %v1668 = vpop.f32.mrf.mxu0
        %v1669 = vpop.f32.mrf.mxu0
        %v1670 = vadd.f32 %v1518, %v1669
        %v1671 = vpop.f32.mrf.mxu0
        %1672 = vmatprep.mubr.bf16.mxu0 0
        %1673 = vmatmul.mubr.bf16.gmra.mxu0 %v1488
        %v1674 = vpop.f32.mrf.mxu0
        %v1675 = vadd.f32 %v1518, %v1674
        %v1676 = vpop.f32.mrf.mxu0
        %v1677 = vpop.f32.mrf.mxu0
        %v1678 = vadd.f32 %v1518, %v1677
        %v1679 = vpop.f32.mrf.mxu0
        %1680 = vmatprep.mubr.bf16.mxu0 0
        %1681 = vmatmul.mubr.bf16.gmra.mxu0 %v1489
        %v1682 = vpop.f32.mrf.mxu0
        %v1683 = vadd.f32 %v1518, %v1682
        %v1684 = vpop.f32.mrf.mxu0
        %v1685 = vpop.f32.mrf.mxu0
        %v1686 = vadd.f32 %v1518, %v1685
        %v1687 = vpop.f32.mrf.mxu0
        %1688 = vmatprep.mubr.bf16.mxu0 0
        %1689 = vmatmul.mubr.bf16.gmra.mxu0 %v1490
        %v1690 = vpop.f32.mrf.mxu0
        %v1691 = vadd.f32 %v1518, %v1690
        %v1692 = vpop.f32.mrf.mxu0
        %v1693 = vpop.f32.mrf.mxu0
        %v1694 = vadd.f32 %v1518, %v1693
        %v1695 = vpop.f32.mrf.mxu0
        %1696 = vmatprep.mubr.bf16.mxu0 0
        %1697 = vmatmul.mubr.bf16.gmra.mxu0 %v1491
        %v1698 = vpop.f32.mrf.mxu0
        %v1699 = vadd.f32 %v1518, %v1698
        %v1700 = vpop.f32.mrf.mxu0
        %v1701 = vpop.f32.mrf.mxu0
        %v1702 = vadd.f32 %v1518, %v1701
        %v1703 = vpop.f32.mrf.mxu0
        %1704 = vmatprep.mubr.bf16.mxu0 0
        %1705 = vmatmul.mubr.bf16.gmra.mxu0 %v1492
        %v1706 = vpop.f32.mrf.mxu0
        %v1707 = vadd.f32 %v1518, %v1706
        %v1708 = vpop.f32.mrf.mxu0
        %v1709 = vpop.f32.mrf.mxu0
        %v1710 = vadd.f32 %v1518, %v1709
        %v1711 = vpop.f32.mrf.mxu0
        %1712 = vmatprep.mubr.bf16.mxu0 0
        %1713 = vmatmul.mubr.bf16.gmra.mxu0 %v1493
        %v1714 = vpop.f32.mrf.mxu0
        %v1715 = vadd.f32 %v1518, %v1714
        %v1716 = vpop.f32.mrf.mxu0
        %v1717 = vpop.f32.mrf.mxu0
        %v1718 = vadd.f32 %v1518, %v1717
        %v1719 = vpop.f32.mrf.mxu0
        %1720 = vmatprep.mubr.bf16.mxu0 0
        %1721 = vmatmul.mubr.bf16.gmra.mxu0 %v1494
        %v1722 = vpop.f32.mrf.mxu0
        %v1723 = vadd.f32 %v1518, %v1722
        %v1724 = vpop.f32.mrf.mxu0
        %v1725 = vpop.f32.mrf.mxu0
        %v1726 = vadd.f32 %v1518, %v1725
        %v1727 = vpop.f32.mrf.mxu0
        %1728 = vdwg.mxu0
        %v1729 = vadd.f32 %v1165, %v1603
        %v1730 = vadd.f32 %v1166, %v1606
        %v1731 = vadd.f32 %v1167, %v1611
        %v1732 = vadd.f32 %v1168, %v1614
        %v1733 = vadd.f32 %v1169, %v1619
        %v1734 = vadd.f32 %v1170, %v1622
        %v1735 = vadd.f32 %v1171, %v1627
        %v1736 = vadd.f32 %v1172, %v1630
        %v1737 = vadd.f32 %v1173, %v1635
        %v1738 = vadd.f32 %v1174, %v1638
        %v1739 = vadd.f32 %v1175, %v1643
        %v1740 = vadd.f32 %v1176, %v1646
        %v1741 = vadd.f32 %v1177, %v1651
        %v1742 = vadd.f32 %v1178, %v1654
        %v1743 = vadd.f32 %v1179, %v1659
        %v1744 = vadd.f32 %v1180, %v1662
        %v1745 = vadd.f32 %v1181, %v1667
        %v1746 = vadd.f32 %v1182, %v1670
        %v1747 = vadd.f32 %v1183, %v1675
        %v1748 = vadd.f32 %v1184, %v1678
        %v1749 = vadd.f32 %v1185, %v1683
        %v1750 = vadd.f32 %v1186, %v1686
        %v1751 = vadd.f32 %v1187, %v1691
        %v1752 = vadd.f32 %v1188, %v1694
        %v1753 = vadd.f32 %v1189, %v1699
        %v1754 = vadd.f32 %v1190, %v1702
        %v1755 = vadd.f32 %v1191, %v1707
        %v1756 = vadd.f32 %v1192, %v1710
        %v1757 = vadd.f32 %v1193, %v1715
        %v1758 = vadd.f32 %v1194, %v1718
        %v1759 = vadd.f32 %v1195, %v1723
        %v1760 = vadd.f32 %v1196, %v1726
        %v1761 = vmax.f32 %v1729, 0.0
        %v1762 = vmax.f32 %v1730, 0.0
        %v1763 = vmax.f32 %v1731, 0.0
        %v1764 = vmax.f32 %v1732, 0.0
        %v1765 = vmax.f32 %v1733, 0.0
        %v1766 = vmax.f32 %v1734, 0.0
        %v1767 = vmax.f32 %v1735, 0.0
        %v1768 = vmax.f32 %v1736, 0.0
        %v1769 = vmax.f32 %v1737, 0.0
        %v1770 = vmax.f32 %v1738, 0.0
        %v1771 = vmax.f32 %v1739, 0.0
        %v1772 = vmax.f32 %v1740, 0.0
        %v1773 = vmax.f32 %v1741, 0.0
        %v1774 = vmax.f32 %v1742, 0.0
        %v1775 = vmax.f32 %v1743, 0.0
        %v1776 = vmax.f32 %v1744, 0.0
        %v1777 = vmax.f32 %v1745, 0.0
        %v1778 = vmax.f32 %v1746, 0.0
        %v1779 = vmax.f32 %v1747, 0.0
        %v1780 = vmax.f32 %v1748, 0.0
        %v1781 = vmax.f32 %v1749, 0.0
        %v1782 = vmax.f32 %v1750, 0.0
        %v1783 = vmax.f32 %v1751, 0.0
        %v1784 = vmax.f32 %v1752, 0.0
        %v1785 = vmax.f32 %v1753, 0.0
        %v1786 = vmax.f32 %v1754, 0.0
        %v1787 = vmax.f32 %v1755, 0.0
        %v1788 = vmax.f32 %v1756, 0.0
        %v1789 = vmax.f32 %v1757, 0.0
        %v1790 = vmax.f32 %v1758, 0.0
        %v1791 = vmax.f32 %v1759, 0.0
        %v1792 = vmax.f32 %v1760, 0.0
        %v1793 = vpack.c.bf16 %v1762, %v1761
        %v1794 = vpack.c.bf16 %v1764, %v1763
        %v1795 = vpack.c.bf16 %v1766, %v1765
        %v1796 = vpack.c.bf16 %v1768, %v1767
        %v1797 = vpack.c.bf16 %v1770, %v1769
        %v1798 = vpack.c.bf16 %v1772, %v1771
        %v1799 = vpack.c.bf16 %v1774, %v1773
        %v1800 = vpack.c.bf16 %v1776, %v1775
        %v1801 = vpack.c.bf16 %v1778, %v1777
        %v1802 = vpack.c.bf16 %v1780, %v1779
        %v1803 = vpack.c.bf16 %v1782, %v1781
        %v1804 = vpack.c.bf16 %v1784, %v1783
        %v1805 = vpack.c.bf16 %v1786, %v1785
        %v1806 = vpack.c.bf16 %v1788, %v1787
        %v1807 = vpack.c.bf16 %v1790, %v1789
        %v1808 = vpack.c.bf16 %v1792, %v1791
        %s1809 = scalar_lea.vmem [#allocation7], 320
        %v1810 = vld [vmem:[%s1809] sm:$0xf]
        %v1811 = vld [vmem:[%s1809 + $0x4] sm:$0xf]
        %v1812 = vld [vmem:[%s1809 + $0x8] sm:$0xf]
        %v1813 = vld [vmem:[%s1809 + $0xc] sm:$0xf]
        %v1814 = vld [vmem:[%s1809 + $0x10] sm:$0xf]
        %v1815 = vld [vmem:[%s1809 + $0x14] sm:$0xf]
        %v1816 = vld [vmem:[%s1809 + $0x18] sm:$0xf]
        %v1817 = vld [vmem:[%s1809 + $0x1c] sm:$0xf]
        %v1818 = vld [vmem:[%s1809 + $0x20] sm:$0xf]
        %v1819 = vld [vmem:[%s1809 + $0x24] sm:$0xf]
        %v1820 = vld [vmem:[%s1809 + $0x28] sm:$0xf]
        %v1821 = vld [vmem:[%s1809 + $0x2c] sm:$0xf]
        %v1822 = vld [vmem:[%s1809 + $0x30] sm:$0xf]
        %v1823 = vld [vmem:[%s1809 + $0x34] sm:$0xf]
        %v1824 = vld [vmem:[%s1809 + $0x38] sm:$0xf]
        %v1825 = vld [vmem:[%s1809 + $0x3c] sm:$0xf]
        %s1826 = scalar_lea.vmem [#allocation8], 5
        %v1827 = vld [vmem:[%s1826] sm:$0x1]
        %v1829 = vlaneseq
        %v1830 = vshrl.u32 %v1829, 7
        %v1831 = vsub.s32 0, %v1830
        %v1832 = vrot.slane %v1827, %v1831
        %v1850 = vunpack.c.l.b16 %v1810
        %v1851 = vunpack.c.l.b16 %v1811
        %v1852 = vunpack.c.l.b16 %v1812
        %v1853 = vunpack.c.l.b16 %v1813
        %v1854 = vunpack.c.l.b16 %v1814
        %v1855 = vunpack.c.l.b16 %v1815
        %v1856 = vunpack.c.l.b16 %v1816
        %v1857 = vunpack.c.l.b16 %v1817
        %v1858 = vunpack.c.l.b16 %v1818
        %v1859 = vunpack.c.l.b16 %v1819
        %v1860 = vunpack.c.l.b16 %v1820
        %v1861 = vunpack.c.l.b16 %v1821
        %v1862 = vunpack.c.l.b16 %v1822
        %v1863 = vunpack.c.l.b16 %v1823
        %v1864 = vunpack.c.l.b16 %v1824
        %v1865 = vunpack.c.l.b16 %v1825
        %v1866 = vpack.c.b16 %v1851, %v1850
        %v1867 = vpack.c.b16 %v1853, %v1852
        %v1868 = vpack.c.b16 %v1855, %v1854
        %v1869 = vpack.c.b16 %v1857, %v1856
        %v1870 = vpack.c.b16 %v1859, %v1858
        %v1871 = vpack.c.b16 %v1861, %v1860
        %v1872 = vpack.c.b16 %v1863, %v1862
        %v1873 = vpack.c.b16 %v1865, %v1864
        %1882 = vmatprep.subr.bf16.mxu0 0
        %1883 = vmatpush1.bf16.msra.mxu0 %v1873
        %1884 = vmatprep.subr.bf16.mxu0 0
        %1885 = vmatpush1.bf16.msra.mxu0 %v1872
        %1886 = vmatprep.subr.bf16.mxu0 0
        %1887 = vmatpush1.bf16.msra.mxu0 %v1871
        %1888 = vmatprep.subr.bf16.mxu0 0
        %1889 = vmatpush1.bf16.msra.mxu0 %v1870
        %1890 = vmatprep.subr.bf16.mxu0 0
        %1891 = vmatpush1.bf16.msra.mxu0 %v1869
        %1892 = vmatprep.subr.bf16.mxu0 0
        %1893 = vmatpush1.bf16.msra.mxu0 %v1868
        %1894 = vmatprep.subr.bf16.mxu0 0
        %1895 = vmatpush1.bf16.msra.mxu0 %v1867
        %1896 = vmatprep.subr.bf16.mxu0 0
        %1897 = vmatpush1.bf16.msra.mxu0 %v1866
        %1898 = vmatprep.subr.bf16.mxu0 0
        %1899 = vmatpush2.bf16.msra.mxu0 0
        %1900 = vmatprep.subr.bf16.mxu0 0
        %1901 = vmatpush2.bf16.msra.mxu0 0
        %1902 = vmatprep.subr.bf16.mxu0 0
        %1903 = vmatpush2.bf16.msra.mxu0 0
        %1904 = vmatprep.subr.bf16.mxu0 0
        %1905 = vmatpush2.bf16.msra.mxu0 0
        %1906 = vmatprep.subr.bf16.mxu0 0
        %1907 = vmatpush2.bf16.msra.mxu0 0
        %1908 = vmatprep.subr.bf16.mxu0 0
        %1909 = vmatpush2.bf16.msra.mxu0 0
        %1910 = vmatprep.subr.bf16.mxu0 0
        %1911 = vmatpush2.bf16.msra.mxu0 0
        %1912 = vmatprep.subr.bf16.mxu0 0
        %1913 = vmatpush2.bf16.msra.mxu0 0
        %1914 = vmatprep.mubr.bf16.mxu0 0
        %1915 = vmatmul.mubr.bf16.gmra.mxu0 %v1793
        %v1916 = vpop.f32.mrf.mxu0
        %v1917 = vadd.f32 %v1832, %v1916
        %v1918 = vpop.f32.mrf.mxu0
        %v1919 = vpop.f32.mrf.mxu0
        %v1920 = vadd.f32 %v1832, %v1919
        %v1921 = vpop.f32.mrf.mxu0
        %1922 = vmatprep.mubr.bf16.mxu0 0
        %1923 = vmatmul.mubr.bf16.gmra.mxu0 %v1794
        %v1924 = vpop.f32.mrf.mxu0
        %v1925 = vadd.f32 %v1832, %v1924
        %v1926 = vpop.f32.mrf.mxu0
        %v1927 = vpop.f32.mrf.mxu0
        %v1928 = vadd.f32 %v1832, %v1927
        %v1929 = vpop.f32.mrf.mxu0
        %1930 = vmatprep.mubr.bf16.mxu0 0
        %1931 = vmatmul.mubr.bf16.gmra.mxu0 %v1795
        %v1932 = vpop.f32.mrf.mxu0
        %v1933 = vadd.f32 %v1832, %v1932
        %v1934 = vpop.f32.mrf.mxu0
        %v1935 = vpop.f32.mrf.mxu0
        %v1936 = vadd.f32 %v1832, %v1935
        %v1937 = vpop.f32.mrf.mxu0
        %1938 = vmatprep.mubr.bf16.mxu0 0
        %1939 = vmatmul.mubr.bf16.gmra.mxu0 %v1796
        %v1940 = vpop.f32.mrf.mxu0
        %v1941 = vadd.f32 %v1832, %v1940
        %v1942 = vpop.f32.mrf.mxu0
        %v1943 = vpop.f32.mrf.mxu0
        %v1944 = vadd.f32 %v1832, %v1943
        %v1945 = vpop.f32.mrf.mxu0
        %1946 = vmatprep.mubr.bf16.mxu0 0
        %1947 = vmatmul.mubr.bf16.gmra.mxu0 %v1797
        %v1948 = vpop.f32.mrf.mxu0
        %v1949 = vadd.f32 %v1832, %v1948
        %v1950 = vpop.f32.mrf.mxu0
        %v1951 = vpop.f32.mrf.mxu0
        %v1952 = vadd.f32 %v1832, %v1951
        %v1953 = vpop.f32.mrf.mxu0
        %1954 = vmatprep.mubr.bf16.mxu0 0
        %1955 = vmatmul.mubr.bf16.gmra.mxu0 %v1798
        %v1956 = vpop.f32.mrf.mxu0
        %v1957 = vadd.f32 %v1832, %v1956
        %v1958 = vpop.f32.mrf.mxu0
        %v1959 = vpop.f32.mrf.mxu0
        %v1960 = vadd.f32 %v1832, %v1959
        %v1961 = vpop.f32.mrf.mxu0
        %1962 = vmatprep.mubr.bf16.mxu0 0
        %1963 = vmatmul.mubr.bf16.gmra.mxu0 %v1799
        %v1964 = vpop.f32.mrf.mxu0
        %v1965 = vadd.f32 %v1832, %v1964
        %v1966 = vpop.f32.mrf.mxu0
        %v1967 = vpop.f32.mrf.mxu0
        %v1968 = vadd.f32 %v1832, %v1967
        %v1969 = vpop.f32.mrf.mxu0
        %1970 = vmatprep.mubr.bf16.mxu0 0
        %1971 = vmatmul.mubr.bf16.gmra.mxu0 %v1800
        %v1972 = vpop.f32.mrf.mxu0
        %v1973 = vadd.f32 %v1832, %v1972
        %v1974 = vpop.f32.mrf.mxu0
        %v1975 = vpop.f32.mrf.mxu0
        %v1976 = vadd.f32 %v1832, %v1975
        %v1977 = vpop.f32.mrf.mxu0
        %1978 = vmatprep.mubr.bf16.mxu0 0
        %1979 = vmatmul.mubr.bf16.gmra.mxu0 %v1801
        %v1980 = vpop.f32.mrf.mxu0
        %v1981 = vadd.f32 %v1832, %v1980
        %v1982 = vpop.f32.mrf.mxu0
        %v1983 = vpop.f32.mrf.mxu0
        %v1984 = vadd.f32 %v1832, %v1983
        %v1985 = vpop.f32.mrf.mxu0
        %1986 = vmatprep.mubr.bf16.mxu0 0
        %1987 = vmatmul.mubr.bf16.gmra.mxu0 %v1802
        %v1988 = vpop.f32.mrf.mxu0
        %v1989 = vadd.f32 %v1832, %v1988
        %v1990 = vpop.f32.mrf.mxu0
        %v1991 = vpop.f32.mrf.mxu0
        %v1992 = vadd.f32 %v1832, %v1991
        %v1993 = vpop.f32.mrf.mxu0
        %1994 = vmatprep.mubr.bf16.mxu0 0
        %1995 = vmatmul.mubr.bf16.gmra.mxu0 %v1803
        %v1996 = vpop.f32.mrf.mxu0
        %v1997 = vadd.f32 %v1832, %v1996
        %v1998 = vpop.f32.mrf.mxu0
        %v1999 = vpop.f32.mrf.mxu0
        %v2000 = vadd.f32 %v1832, %v1999
        %v2001 = vpop.f32.mrf.mxu0
        %2002 = vmatprep.mubr.bf16.mxu0 0
        %2003 = vmatmul.mubr.bf16.gmra.mxu0 %v1804
        %v2004 = vpop.f32.mrf.mxu0
        %v2005 = vadd.f32 %v1832, %v2004
        %v2006 = vpop.f32.mrf.mxu0
        %v2007 = vpop.f32.mrf.mxu0
        %v2008 = vadd.f32 %v1832, %v2007
        %v2009 = vpop.f32.mrf.mxu0
        %2010 = vmatprep.mubr.bf16.mxu0 0
        %2011 = vmatmul.mubr.bf16.gmra.mxu0 %v1805
        %v2012 = vpop.f32.mrf.mxu0
        %v2013 = vadd.f32 %v1832, %v2012
        %v2014 = vpop.f32.mrf.mxu0
        %v2015 = vpop.f32.mrf.mxu0
        %v2016 = vadd.f32 %v1832, %v2015
        %v2017 = vpop.f32.mrf.mxu0
        %2018 = vmatprep.mubr.bf16.mxu0 0
        %2019 = vmatmul.mubr.bf16.gmra.mxu0 %v1806
        %v2020 = vpop.f32.mrf.mxu0
        %v2021 = vadd.f32 %v1832, %v2020
        %v2022 = vpop.f32.mrf.mxu0
        %v2023 = vpop.f32.mrf.mxu0
        %v2024 = vadd.f32 %v1832, %v2023
        %v2025 = vpop.f32.mrf.mxu0
        %2026 = vmatprep.mubr.bf16.mxu0 0
        %2027 = vmatmul.mubr.bf16.gmra.mxu0 %v1807
        %v2028 = vpop.f32.mrf.mxu0
        %v2029 = vadd.f32 %v1832, %v2028
        %v2030 = vpop.f32.mrf.mxu0
        %v2031 = vpop.f32.mrf.mxu0
        %v2032 = vadd.f32 %v1832, %v2031
        %v2033 = vpop.f32.mrf.mxu0
        %2034 = vmatprep.mubr.bf16.mxu0 0
        %2035 = vmatmul.mubr.bf16.gmra.mxu0 %v1808
        %v2036 = vpop.f32.mrf.mxu0
        %v2037 = vadd.f32 %v1832, %v2036
        %v2038 = vpop.f32.mrf.mxu0
        %v2039 = vpop.f32.mrf.mxu0
        %v2040 = vadd.f32 %v1832, %v2039
        %v2041 = vpop.f32.mrf.mxu0
        %2042 = vdwg.mxu0
        %v2043 = vld [vmem:[%s247] sm:$0xff]
        %v2044 = vld [vmem:[%s247 + $0x8] sm:$0xff]
        %v2045 = vld [vmem:[%s247 + $0x10] sm:$0xff]
        %v2046 = vld [vmem:[%s247 + $0x18] sm:$0xff]
        %v2047 = vld [vmem:[%s247 + $0x20] sm:$0xff]
        %v2048 = vld [vmem:[%s247 + $0x28] sm:$0xff]
        %v2049 = vld [vmem:[%s247 + $0x30] sm:$0xff]
        %v2050 = vld [vmem:[%s247 + $0x38] sm:$0xff]
        %v2051 = vld [vmem:[%s247 + $0x40] sm:$0xff]
        %v2052 = vld [vmem:[%s247 + $0x48] sm:$0xff]
        %v2053 = vld [vmem:[%s247 + $0x50] sm:$0xff]
        %v2054 = vld [vmem:[%s247 + $0x58] sm:$0xff]
        %v2055 = vld [vmem:[%s247 + $0x60] sm:$0xff]
        %v2056 = vld [vmem:[%s247 + $0x68] sm:$0xff]
        %v2057 = vld [vmem:[%s247 + $0x70] sm:$0xff]
        %v2058 = vld [vmem:[%s247 + $0x78] sm:$0xff]
        %v2059 = vld [vmem:[%s247 + $0x80] sm:$0xff]
        %v2060 = vld [vmem:[%s247 + $0x88] sm:$0xff]
        %v2061 = vld [vmem:[%s247 + $0x90] sm:$0xff]
        %v2062 = vld [vmem:[%s247 + $0x98] sm:$0xff]
        %v2063 = vld [vmem:[%s247 + $0xa0] sm:$0xff]
        %v2064 = vld [vmem:[%s247 + $0xa8] sm:$0xff]
        %v2065 = vld [vmem:[%s247 + $0xb0] sm:$0xff]
        %v2066 = vld [vmem:[%s247 + $0xb8] sm:$0xff]
        %v2067 = vld [vmem:[%s247 + $0xc0] sm:$0xff]
        %v2068 = vld [vmem:[%s247 + $0xc8] sm:$0xff]
        %v2069 = vld [vmem:[%s247 + $0xd0] sm:$0xff]
        %v2070 = vld [vmem:[%s247 + $0xd8] sm:$0xff]
        %v2071 = vld [vmem:[%s247 + $0xe0] sm:$0xff]
        %v2072 = vld [vmem:[%s247 + $0xe8] sm:$0xff]
        %v2073 = vld [vmem:[%s247 + $0xf0] sm:$0xff]
        %v2074 = vld [vmem:[%s247 + $0xf8] sm:$0xff]
        %v2075 = vadd.f32 %v1917, %v2043
        %v2076 = vadd.f32 %v1920, %v2044
        %v2077 = vadd.f32 %v1925, %v2045
        %v2078 = vadd.f32 %v1928, %v2046
        %v2079 = vadd.f32 %v1933, %v2047
        %v2080 = vadd.f32 %v1936, %v2048
        %v2081 = vadd.f32 %v1941, %v2049
        %v2082 = vadd.f32 %v1944, %v2050
        %v2083 = vadd.f32 %v1949, %v2051
        %v2084 = vadd.f32 %v1952, %v2052
        %v2085 = vadd.f32 %v1957, %v2053
        %v2086 = vadd.f32 %v1960, %v2054
        %v2087 = vadd.f32 %v1965, %v2055
        %v2088 = vadd.f32 %v1968, %v2056
        %v2089 = vadd.f32 %v1973, %v2057
        %v2090 = vadd.f32 %v1976, %v2058
        %v2091 = vadd.f32 %v1981, %v2059
        %v2092 = vadd.f32 %v1984, %v2060
        %v2093 = vadd.f32 %v1989, %v2061
        %v2094 = vadd.f32 %v1992, %v2062
        %v2095 = vadd.f32 %v1997, %v2063
        %v2096 = vadd.f32 %v2000, %v2064
        %v2097 = vadd.f32 %v2005, %v2065
        %v2098 = vadd.f32 %v2008, %v2066
        %v2099 = vadd.f32 %v2013, %v2067
        %v2100 = vadd.f32 %v2016, %v2068
        %v2101 = vadd.f32 %v2021, %v2069
        %v2102 = vadd.f32 %v2024, %v2070
        %v2103 = vadd.f32 %v2029, %v2071
        %v2104 = vadd.f32 %v2032, %v2072
        %v2105 = vadd.f32 %v2037, %v2073
        %v2106 = vadd.f32 %v2040, %v2074
        %vm2107 = vcmask 523264
        %v2108 = vsel %vm2107, %v2075, -inf
        %v2109 = vrot.slane %v2108, 4
        %v2110 = vmax.f32 %v2108, %v2109
        %v2111 = vrot.slane %v2110, 2
        %v2112 = vmax.f32 %v2110, %v2111
        %v2113 = vrot.slane %v2112, 1
        %v2114 = vmax.f32 %v2112, %v2113
        %v2115 = vsel %vm2107, %v2076, -inf
        %v2116 = vrot.slane %v2115, 4
        %v2117 = vmax.f32 %v2115, %v2116
        %v2118 = vrot.slane %v2117, 2
        %v2119 = vmax.f32 %v2117, %v2118
        %v2120 = vrot.slane %v2119, 1
        %v2121 = vmax.f32 %v2119, %v2120
        %v2122 = vsel %vm2107, %v2077, -inf
        %v2123 = vrot.slane %v2122, 4
        %v2124 = vmax.f32 %v2122, %v2123
        %v2125 = vrot.slane %v2124, 2
        %v2126 = vmax.f32 %v2124, %v2125
        %v2127 = vrot.slane %v2126, 1
        %v2128 = vmax.f32 %v2126, %v2127
        %v2129 = vsel %vm2107, %v2078, -inf
        %v2130 = vrot.slane %v2129, 4
        %v2131 = vmax.f32 %v2129, %v2130
        %v2132 = vrot.slane %v2131, 2
        %v2133 = vmax.f32 %v2131, %v2132
        %v2134 = vrot.slane %v2133, 1
        %v2135 = vmax.f32 %v2133, %v2134
        %v2136 = vsel %vm2107, %v2079, -inf
        %v2137 = vrot.slane %v2136, 4
        %v2138 = vmax.f32 %v2136, %v2137
        %v2139 = vrot.slane %v2138, 2
        %v2140 = vmax.f32 %v2138, %v2139
        %v2141 = vrot.slane %v2140, 1
        %v2142 = vmax.f32 %v2140, %v2141
        %v2143 = vsel %vm2107, %v2080, -inf
        %v2144 = vrot.slane %v2143, 4
        %v2145 = vmax.f32 %v2143, %v2144
        %v2146 = vrot.slane %v2145, 2
        %v2147 = vmax.f32 %v2145, %v2146
        %v2148 = vrot.slane %v2147, 1
        %v2149 = vmax.f32 %v2147, %v2148
        %v2150 = vsel %vm2107, %v2081, -inf
        %v2151 = vrot.slane %v2150, 4
        %v2152 = vmax.f32 %v2150, %v2151
        %v2153 = vrot.slane %v2152, 2
        %v2154 = vmax.f32 %v2152, %v2153
        %v2155 = vrot.slane %v2154, 1
        %v2156 = vmax.f32 %v2154, %v2155
        %v2157 = vsel %vm2107, %v2082, -inf
        %v2158 = vrot.slane %v2157, 4
        %v2159 = vmax.f32 %v2157, %v2158
        %v2160 = vrot.slane %v2159, 2
        %v2161 = vmax.f32 %v2159, %v2160
        %v2162 = vrot.slane %v2161, 1
        %v2163 = vmax.f32 %v2161, %v2162
        %v2164 = vsel %vm2107, %v2083, -inf
        %v2165 = vrot.slane %v2164, 4
        %v2166 = vmax.f32 %v2164, %v2165
        %v2167 = vrot.slane %v2166, 2
        %v2168 = vmax.f32 %v2166, %v2167
        %v2169 = vrot.slane %v2168, 1
        %v2170 = vmax.f32 %v2168, %v2169
        %v2171 = vsel %vm2107, %v2084, -inf
        %v2172 = vrot.slane %v2171, 4
        %v2173 = vmax.f32 %v2171, %v2172
        %v2174 = vrot.slane %v2173, 2
        %v2175 = vmax.f32 %v2173, %v2174
        %v2176 = vrot.slane %v2175, 1
        %v2177 = vmax.f32 %v2175, %v2176
        %v2178 = vsel %vm2107, %v2085, -inf
        %v2179 = vrot.slane %v2178, 4
        %v2180 = vmax.f32 %v2178, %v2179
        %v2181 = vrot.slane %v2180, 2
        %v2182 = vmax.f32 %v2180, %v2181
        %v2183 = vrot.slane %v2182, 1
        %v2184 = vmax.f32 %v2182, %v2183
        %v2185 = vsel %vm2107, %v2086, -inf
        %v2186 = vrot.slane %v2185, 4
        %v2187 = vmax.f32 %v2185, %v2186
        %v2188 = vrot.slane %v2187, 2
        %v2189 = vmax.f32 %v2187, %v2188
        %v2190 = vrot.slane %v2189, 1
        %v2191 = vmax.f32 %v2189, %v2190
        %v2192 = vsel %vm2107, %v2087, -inf
        %v2193 = vrot.slane %v2192, 4
        %v2194 = vmax.f32 %v2192, %v2193
        %v2195 = vrot.slane %v2194, 2
        %v2196 = vmax.f32 %v2194, %v2195
        %v2197 = vrot.slane %v2196, 1
        %v2198 = vmax.f32 %v2196, %v2197
        %v2199 = vsel %vm2107, %v2088, -inf
        %v2200 = vrot.slane %v2199, 4
        %v2201 = vmax.f32 %v2199, %v2200
        %v2202 = vrot.slane %v2201, 2
        %v2203 = vmax.f32 %v2201, %v2202
        %v2204 = vrot.slane %v2203, 1
        %v2205 = vmax.f32 %v2203, %v2204
        %v2206 = vsel %vm2107, %v2089, -inf
        %v2207 = vrot.slane %v2206, 4
        %v2208 = vmax.f32 %v2206, %v2207
        %v2209 = vrot.slane %v2208, 2
        %v2210 = vmax.f32 %v2208, %v2209
        %v2211 = vrot.slane %v2210, 1
        %v2212 = vmax.f32 %v2210, %v2211
        %v2213 = vsel %vm2107, %v2090, -inf
        %v2214 = vrot.slane %v2213, 4
        %v2215 = vmax.f32 %v2213, %v2214
        %v2216 = vrot.slane %v2215, 2
        %v2217 = vmax.f32 %v2215, %v2216
        %v2218 = vrot.slane %v2217, 1
        %v2219 = vmax.f32 %v2217, %v2218
        %v2220 = vsel %vm2107, %v2091, -inf
        %v2221 = vrot.slane %v2220, 4
        %v2222 = vmax.f32 %v2220, %v2221
        %v2223 = vrot.slane %v2222, 2
        %v2224 = vmax.f32 %v2222, %v2223
        %v2225 = vrot.slane %v2224, 1
        %v2226 = vmax.f32 %v2224, %v2225
        %v2227 = vsel %vm2107, %v2092, -inf
        %v2228 = vrot.slane %v2227, 4
        %v2229 = vmax.f32 %v2227, %v2228
        %v2230 = vrot.slane %v2229, 2
        %v2231 = vmax.f32 %v2229, %v2230
        %v2232 = vrot.slane %v2231, 1
        %v2233 = vmax.f32 %v2231, %v2232
        %v2234 = vsel %vm2107, %v2093, -inf
        %v2235 = vrot.slane %v2234, 4
        %v2236 = vmax.f32 %v2234, %v2235
        %v2237 = vrot.slane %v2236, 2
        %v2238 = vmax.f32 %v2236, %v2237
        %v2239 = vrot.slane %v2238, 1
        %v2240 = vmax.f32 %v2238, %v2239
        %v2241 = vsel %vm2107, %v2094, -inf
        %v2242 = vrot.slane %v2241, 4
        %v2243 = vmax.f32 %v2241, %v2242
        %v2244 = vrot.slane %v2243, 2
        %v2245 = vmax.f32 %v2243, %v2244
        %v2246 = vrot.slane %v2245, 1
        %v2247 = vmax.f32 %v2245, %v2246
        %v2248 = vsel %vm2107, %v2095, -inf
        %v2249 = vrot.slane %v2248, 4
        %v2250 = vmax.f32 %v2248, %v2249
        %v2251 = vrot.slane %v2250, 2
        %v2252 = vmax.f32 %v2250, %v2251
        %v2253 = vrot.slane %v2252, 1
        %v2254 = vmax.f32 %v2252, %v2253
        %v2255 = vsel %vm2107, %v2096, -inf
        %v2256 = vrot.slane %v2255, 4
        %v2257 = vmax.f32 %v2255, %v2256
        %v2258 = vrot.slane %v2257, 2
        %v2259 = vmax.f32 %v2257, %v2258
        %v2260 = vrot.slane %v2259, 1
        %v2261 = vmax.f32 %v2259, %v2260
        %v2262 = vsel %vm2107, %v2097, -inf
        %v2263 = vrot.slane %v2262, 4
        %v2264 = vmax.f32 %v2262, %v2263
        %v2265 = vrot.slane %v2264, 2
        %v2266 = vmax.f32 %v2264, %v2265
        %v2267 = vrot.slane %v2266, 1
        %v2268 = vmax.f32 %v2266, %v2267
        %v2269 = vsel %vm2107, %v2098, -inf
        %v2270 = vrot.slane %v2269, 4
        %v2271 = vmax.f32 %v2269, %v2270
        %v2272 = vrot.slane %v2271, 2
        %v2273 = vmax.f32 %v2271, %v2272
        %v2274 = vrot.slane %v2273, 1
        %v2275 = vmax.f32 %v2273, %v2274
        %v2276 = vsel %vm2107, %v2099, -inf
        %v2277 = vrot.slane %v2276, 4
        %v2278 = vmax.f32 %v2276, %v2277
        %v2279 = vrot.slane %v2278, 2
        %v2280 = vmax.f32 %v2278, %v2279
        %v2281 = vrot.slane %v2280, 1
        %v2282 = vmax.f32 %v2280, %v2281
        %v2283 = vsel %vm2107, %v2100, -inf
        %v2284 = vrot.slane %v2283, 4
        %v2285 = vmax.f32 %v2283, %v2284
        %v2286 = vrot.slane %v2285, 2
        %v2287 = vmax.f32 %v2285, %v2286
        %v2288 = vrot.slane %v2287, 1
        %v2289 = vmax.f32 %v2287, %v2288
        %v2290 = vsel %vm2107, %v2101, -inf
        %v2291 = vrot.slane %v2290, 4
        %v2292 = vmax.f32 %v2290, %v2291
        %v2293 = vrot.slane %v2292, 2
        %v2294 = vmax.f32 %v2292, %v2293
        %v2295 = vrot.slane %v2294, 1
        %v2296 = vmax.f32 %v2294, %v2295
        %v2297 = vsel %vm2107, %v2102, -inf
        %v2298 = vrot.slane %v2297, 4
        %v2299 = vmax.f32 %v2297, %v2298
        %v2300 = vrot.slane %v2299, 2
        %v2301 = vmax.f32 %v2299, %v2300
        %v2302 = vrot.slane %v2301, 1
        %v2303 = vmax.f32 %v2301, %v2302
        %v2304 = vsel %vm2107, %v2103, -inf
        %v2305 = vrot.slane %v2304, 4
        %v2306 = vmax.f32 %v2304, %v2305
        %v2307 = vrot.slane %v2306, 2
        %v2308 = vmax.f32 %v2306, %v2307
        %v2309 = vrot.slane %v2308, 1
        %v2310 = vmax.f32 %v2308, %v2309
        %v2311 = vsel %vm2107, %v2104, -inf
        %v2312 = vrot.slane %v2311, 4
        %v2313 = vmax.f32 %v2311, %v2312
        %v2314 = vrot.slane %v2313, 2
        %v2315 = vmax.f32 %v2313, %v2314
        %v2316 = vrot.slane %v2315, 1
        %v2317 = vmax.f32 %v2315, %v2316
        %v2318 = vsel %vm2107, %v2105, -inf
        %v2319 = vrot.slane %v2318, 4
        %v2320 = vmax.f32 %v2318, %v2319
        %v2321 = vrot.slane %v2320, 2
        %v2322 = vmax.f32 %v2320, %v2321
        %v2323 = vrot.slane %v2322, 1
        %v2324 = vmax.f32 %v2322, %v2323
        %v2325 = vsel %vm2107, %v2106, -inf
        %v2326 = vrot.slane %v2325, 4
        %v2327 = vmax.f32 %v2325, %v2326
        %v2328 = vrot.slane %v2327, 2
        %v2329 = vmax.f32 %v2327, %v2328
        %v2330 = vrot.slane %v2329, 1
        %v2331 = vmax.f32 %v2329, %v2330
        %v2332 = vsub.f32 %v2075, %v2114
        %v2333 = vsub.f32 %v2076, %v2121
        %v2334 = vsub.f32 %v2077, %v2128
        %v2335 = vsub.f32 %v2078, %v2135
        %v2336 = vsub.f32 %v2079, %v2142
        %v2337 = vsub.f32 %v2080, %v2149
        %v2338 = vsub.f32 %v2081, %v2156
        %v2339 = vsub.f32 %v2082, %v2163
        %v2340 = vsub.f32 %v2083, %v2170
        %v2341 = vsub.f32 %v2084, %v2177
        %v2342 = vsub.f32 %v2085, %v2184
        %v2343 = vsub.f32 %v2086, %v2191
        %v2344 = vsub.f32 %v2087, %v2198
        %v2345 = vsub.f32 %v2088, %v2205
        %v2346 = vsub.f32 %v2089, %v2212
        %v2347 = vsub.f32 %v2090, %v2219
        %v2348 = vsub.f32 %v2091, %v2226
        %v2349 = vsub.f32 %v2092, %v2233
        %v2350 = vsub.f32 %v2093, %v2240
        %v2351 = vsub.f32 %v2094, %v2247
        %v2352 = vsub.f32 %v2095, %v2254
        %v2353 = vsub.f32 %v2096, %v2261
        %v2354 = vsub.f32 %v2097, %v2268
        %v2355 = vsub.f32 %v2098, %v2275
        %v2356 = vsub.f32 %v2099, %v2282
        %v2357 = vsub.f32 %v2100, %v2289
        %v2358 = vsub.f32 %v2101, %v2296
        %v2359 = vsub.f32 %v2102, %v2303
        %v2360 = vsub.f32 %v2103, %v2310
        %v2361 = vsub.f32 %v2104, %v2317
        %v2362 = vsub.f32 %v2105, %v2324
        %v2363 = vsub.f32 %v2106, %v2331
        %v2364 = vmul.f32 %v2332, 1.442695
        %v2365 = vpow.pop %v2364
        %v2366 = vmul.f32 %v2333, 1.442695
        %v2367 = vpow.pop %v2366
        %v2368 = vmul.f32 %v2334, 1.442695
        %v2369 = vpow.pop %v2368
        %v2370 = vmul.f32 %v2335, 1.442695
        %v2371 = vpow.pop %v2370
        %v2372 = vmul.f32 %v2336, 1.442695
        %v2373 = vpow.pop %v2372
        %v2374 = vmul.f32 %v2337, 1.442695
        %v2375 = vpow.pop %v2374
        %v2376 = vmul.f32 %v2338, 1.442695
        %v2377 = vpow.pop %v2376
        %v2378 = vmul.f32 %v2339, 1.442695
        %v2379 = vpow.pop %v2378
        %v2380 = vmul.f32 %v2340, 1.442695
        %v2381 = vpow.pop %v2380
        %v2382 = vmul.f32 %v2341, 1.442695
        %v2383 = vpow.pop %v2382
        %v2384 = vmul.f32 %v2342, 1.442695
        %v2385 = vpow.pop %v2384
        %v2386 = vmul.f32 %v2343, 1.442695
        %v2387 = vpow.pop %v2386
        %v2388 = vmul.f32 %v2344, 1.442695
        %v2389 = vpow.pop %v2388
        %v2390 = vmul.f32 %v2345, 1.442695
        %v2391 = vpow.pop %v2390
        %v2392 = vmul.f32 %v2346, 1.442695
        %v2393 = vpow.pop %v2392
        %v2394 = vmul.f32 %v2347, 1.442695
        %v2395 = vpow.pop %v2394
        %v2396 = vmul.f32 %v2348, 1.442695
        %v2397 = vpow.pop %v2396
        %v2398 = vmul.f32 %v2349, 1.442695
        %v2399 = vpow.pop %v2398
        %v2400 = vmul.f32 %v2350, 1.442695
        %v2401 = vpow.pop %v2400
        %v2402 = vmul.f32 %v2351, 1.442695
        %v2403 = vpow.pop %v2402
        %v2404 = vmul.f32 %v2352, 1.442695
        %v2405 = vpow.pop %v2404
        %v2406 = vmul.f32 %v2353, 1.442695
        %v2407 = vpow.pop %v2406
        %v2408 = vmul.f32 %v2354, 1.442695
        %v2409 = vpow.pop %v2408
        %v2410 = vmul.f32 %v2355, 1.442695
        %v2411 = vpow.pop %v2410
        %v2412 = vmul.f32 %v2356, 1.442695
        %v2413 = vpow.pop %v2412
        %v2414 = vmul.f32 %v2357, 1.442695
        %v2415 = vpow.pop %v2414
        %v2416 = vmul.f32 %v2358, 1.442695
        %v2417 = vpow.pop %v2416
        %v2418 = vmul.f32 %v2359, 1.442695
        %v2419 = vpow.pop %v2418
        %v2420 = vmul.f32 %v2360, 1.442695
        %v2421 = vpow.pop %v2420
        %v2422 = vmul.f32 %v2361, 1.442695
        %v2423 = vpow.pop %v2422
        %v2424 = vmul.f32 %v2362, 1.442695
        %v2425 = vpow.pop %v2424
        %v2426 = vmul.f32 %v2363, 1.442695
        %v2427 = vpow.pop %v2426
        %v2428 = vsel %vm2107, %v2365, 0.0
        %v2429 = vrot.slane %v2428, 4
        %v2430 = vadd.f32 %v2428, %v2429
        %v2431 = vrot.slane %v2430, 2
        %v2432 = vadd.f32 %v2430, %v2431
        %v2433 = vrot.slane %v2432, 1
        %v2434 = vadd.f32 %v2432, %v2433
        %v2435 = vsel %vm2107, %v2367, 0.0
        %v2436 = vrot.slane %v2435, 4
        %v2437 = vadd.f32 %v2435, %v2436
        %v2438 = vrot.slane %v2437, 2
        %v2439 = vadd.f32 %v2437, %v2438
        %v2440 = vrot.slane %v2439, 1
        %v2441 = vadd.f32 %v2439, %v2440
        %v2442 = vsel %vm2107, %v2369, 0.0
        %v2443 = vrot.slane %v2442, 4
        %v2444 = vadd.f32 %v2442, %v2443
        %v2445 = vrot.slane %v2444, 2
        %v2446 = vadd.f32 %v2444, %v2445
        %v2447 = vrot.slane %v2446, 1
        %v2448 = vadd.f32 %v2446, %v2447
        %v2449 = vsel %vm2107, %v2371, 0.0
        %v2450 = vrot.slane %v2449, 4
        %v2451 = vadd.f32 %v2449, %v2450
        %v2452 = vrot.slane %v2451, 2
        %v2453 = vadd.f32 %v2451, %v2452
        %v2454 = vrot.slane %v2453, 1
        %v2455 = vadd.f32 %v2453, %v2454
        %v2456 = vsel %vm2107, %v2373, 0.0
        %v2457 = vrot.slane %v2456, 4
        %v2458 = vadd.f32 %v2456, %v2457
        %v2459 = vrot.slane %v2458, 2
        %v2460 = vadd.f32 %v2458, %v2459
        %v2461 = vrot.slane %v2460, 1
        %v2462 = vadd.f32 %v2460, %v2461
        %v2463 = vsel %vm2107, %v2375, 0.0
        %v2464 = vrot.slane %v2463, 4
        %v2465 = vadd.f32 %v2463, %v2464
        %v2466 = vrot.slane %v2465, 2
        %v2467 = vadd.f32 %v2465, %v2466
        %v2468 = vrot.slane %v2467, 1
        %v2469 = vadd.f32 %v2467, %v2468
        %v2470 = vsel %vm2107, %v2377, 0.0
        %v2471 = vrot.slane %v2470, 4
        %v2472 = vadd.f32 %v2470, %v2471
        %v2473 = vrot.slane %v2472, 2
        %v2474 = vadd.f32 %v2472, %v2473
        %v2475 = vrot.slane %v2474, 1
        %v2476 = vadd.f32 %v2474, %v2475
        %v2477 = vsel %vm2107, %v2379, 0.0
        %v2478 = vrot.slane %v2477, 4
        %v2479 = vadd.f32 %v2477, %v2478
        %v2480 = vrot.slane %v2479, 2
        %v2481 = vadd.f32 %v2479, %v2480
        %v2482 = vrot.slane %v2481, 1
        %v2483 = vadd.f32 %v2481, %v2482
        %v2484 = vsel %vm2107, %v2381, 0.0
        %v2485 = vrot.slane %v2484, 4
        %v2486 = vadd.f32 %v2484, %v2485
        %v2487 = vrot.slane %v2486, 2
        %v2488 = vadd.f32 %v2486, %v2487
        %v2489 = vrot.slane %v2488, 1
        %v2490 = vadd.f32 %v2488, %v2489
        %v2491 = vsel %vm2107, %v2383, 0.0
        %v2492 = vrot.slane %v2491, 4
        %v2493 = vadd.f32 %v2491, %v2492
        %v2494 = vrot.slane %v2493, 2
        %v2495 = vadd.f32 %v2493, %v2494
        %v2496 = vrot.slane %v2495, 1
        %v2497 = vadd.f32 %v2495, %v2496
        %v2498 = vsel %vm2107, %v2385, 0.0
        %v2499 = vrot.slane %v2498, 4
        %v2500 = vadd.f32 %v2498, %v2499
        %v2501 = vrot.slane %v2500, 2
        %v2502 = vadd.f32 %v2500, %v2501
        %v2503 = vrot.slane %v2502, 1
        %v2504 = vadd.f32 %v2502, %v2503
        %v2505 = vsel %vm2107, %v2387, 0.0
        %v2506 = vrot.slane %v2505, 4
        %v2507 = vadd.f32 %v2505, %v2506
        %v2508 = vrot.slane %v2507, 2
        %v2509 = vadd.f32 %v2507, %v2508
        %v2510 = vrot.slane %v2509, 1
        %v2511 = vadd.f32 %v2509, %v2510
        %v2512 = vsel %vm2107, %v2389, 0.0
        %v2513 = vrot.slane %v2512, 4
        %v2514 = vadd.f32 %v2512, %v2513
        %v2515 = vrot.slane %v2514, 2
        %v2516 = vadd.f32 %v2514, %v2515
        %v2517 = vrot.slane %v2516, 1
        %v2518 = vadd.f32 %v2516, %v2517
        %v2519 = vsel %vm2107, %v2391, 0.0
        %v2520 = vrot.slane %v2519, 4
        %v2521 = vadd.f32 %v2519, %v2520
        %v2522 = vrot.slane %v2521, 2
        %v2523 = vadd.f32 %v2521, %v2522
        %v2524 = vrot.slane %v2523, 1
        %v2525 = vadd.f32 %v2523, %v2524
        %v2526 = vsel %vm2107, %v2393, 0.0
        %v2527 = vrot.slane %v2526, 4
        %v2528 = vadd.f32 %v2526, %v2527
        %v2529 = vrot.slane %v2528, 2
        %v2530 = vadd.f32 %v2528, %v2529
        %v2531 = vrot.slane %v2530, 1
        %v2532 = vadd.f32 %v2530, %v2531
        %v2533 = vsel %vm2107, %v2395, 0.0
        %v2534 = vrot.slane %v2533, 4
        %v2535 = vadd.f32 %v2533, %v2534
        %v2536 = vrot.slane %v2535, 2
        %v2537 = vadd.f32 %v2535, %v2536
        %v2538 = vrot.slane %v2537, 1
        %v2539 = vadd.f32 %v2537, %v2538
        %v2540 = vsel %vm2107, %v2397, 0.0
        %v2541 = vrot.slane %v2540, 4
        %v2542 = vadd.f32 %v2540, %v2541
        %v2543 = vrot.slane %v2542, 2
        %v2544 = vadd.f32 %v2542, %v2543
        %v2545 = vrot.slane %v2544, 1
        %v2546 = vadd.f32 %v2544, %v2545
        %v2547 = vsel %vm2107, %v2399, 0.0
        %v2548 = vrot.slane %v2547, 4
        %v2549 = vadd.f32 %v2547, %v2548
        %v2550 = vrot.slane %v2549, 2
        %v2551 = vadd.f32 %v2549, %v2550
        %v2552 = vrot.slane %v2551, 1
        %v2553 = vadd.f32 %v2551, %v2552
        %v2554 = vsel %vm2107, %v2401, 0.0
        %v2555 = vrot.slane %v2554, 4
        %v2556 = vadd.f32 %v2554, %v2555
        %v2557 = vrot.slane %v2556, 2
        %v2558 = vadd.f32 %v2556, %v2557
        %v2559 = vrot.slane %v2558, 1
        %v2560 = vadd.f32 %v2558, %v2559
        %v2561 = vsel %vm2107, %v2403, 0.0
        %v2562 = vrot.slane %v2561, 4
        %v2563 = vadd.f32 %v2561, %v2562
        %v2564 = vrot.slane %v2563, 2
        %v2565 = vadd.f32 %v2563, %v2564
        %v2566 = vrot.slane %v2565, 1
        %v2567 = vadd.f32 %v2565, %v2566
        %v2568 = vsel %vm2107, %v2405, 0.0
        %v2569 = vrot.slane %v2568, 4
        %v2570 = vadd.f32 %v2568, %v2569
        %v2571 = vrot.slane %v2570, 2
        %v2572 = vadd.f32 %v2570, %v2571
        %v2573 = vrot.slane %v2572, 1
        %v2574 = vadd.f32 %v2572, %v2573
        %v2575 = vsel %vm2107, %v2407, 0.0
        %v2576 = vrot.slane %v2575, 4
        %v2577 = vadd.f32 %v2575, %v2576
        %v2578 = vrot.slane %v2577, 2
        %v2579 = vadd.f32 %v2577, %v2578
        %v2580 = vrot.slane %v2579, 1
        %v2581 = vadd.f32 %v2579, %v2580
        %v2582 = vsel %vm2107, %v2409, 0.0
        %v2583 = vrot.slane %v2582, 4
        %v2584 = vadd.f32 %v2582, %v2583
        %v2585 = vrot.slane %v2584, 2
        %v2586 = vadd.f32 %v2584, %v2585
        %v2587 = vrot.slane %v2586, 1
        %v2588 = vadd.f32 %v2586, %v2587
        %v2589 = vsel %vm2107, %v2411, 0.0
        %v2590 = vrot.slane %v2589, 4
        %v2591 = vadd.f32 %v2589, %v2590
        %v2592 = vrot.slane %v2591, 2
        %v2593 = vadd.f32 %v2591, %v2592
        %v2594 = vrot.slane %v2593, 1
        %v2595 = vadd.f32 %v2593, %v2594
        %v2596 = vsel %vm2107, %v2413, 0.0
        %v2597 = vrot.slane %v2596, 4
        %v2598 = vadd.f32 %v2596, %v2597
        %v2599 = vrot.slane %v2598, 2
        %v2600 = vadd.f32 %v2598, %v2599
        %v2601 = vrot.slane %v2600, 1
        %v2602 = vadd.f32 %v2600, %v2601
        %v2603 = vsel %vm2107, %v2415, 0.0
        %v2604 = vrot.slane %v2603, 4
        %v2605 = vadd.f32 %v2603, %v2604
        %v2606 = vrot.slane %v2605, 2
        %v2607 = vadd.f32 %v2605, %v2606
        %v2608 = vrot.slane %v2607, 1
        %v2609 = vadd.f32 %v2607, %v2608
        %v2610 = vsel %vm2107, %v2417, 0.0
        %v2611 = vrot.slane %v2610, 4
        %v2612 = vadd.f32 %v2610, %v2611
        %v2613 = vrot.slane %v2612, 2
        %v2614 = vadd.f32 %v2612, %v2613
        %v2615 = vrot.slane %v2614, 1
        %v2616 = vadd.f32 %v2614, %v2615
        %v2617 = vsel %vm2107, %v2419, 0.0
        %v2618 = vrot.slane %v2617, 4
        %v2619 = vadd.f32 %v2617, %v2618
        %v2620 = vrot.slane %v2619, 2
        %v2621 = vadd.f32 %v2619, %v2620
        %v2622 = vrot.slane %v2621, 1
        %v2623 = vadd.f32 %v2621, %v2622
        %v2624 = vsel %vm2107, %v2421, 0.0
        %v2625 = vrot.slane %v2624, 4
        %v2626 = vadd.f32 %v2624, %v2625
        %v2627 = vrot.slane %v2626, 2
        %v2628 = vadd.f32 %v2626, %v2627
        %v2629 = vrot.slane %v2628, 1
        %v2630 = vadd.f32 %v2628, %v2629
        %v2631 = vsel %vm2107, %v2423, 0.0
        %v2632 = vrot.slane %v2631, 4
        %v2633 = vadd.f32 %v2631, %v2632
        %v2634 = vrot.slane %v2633, 2
        %v2635 = vadd.f32 %v2633, %v2634
        %v2636 = vrot.slane %v2635, 1
        %v2637 = vadd.f32 %v2635, %v2636
        %v2638 = vsel %vm2107, %v2425, 0.0
        %v2639 = vrot.slane %v2638, 4
        %v2640 = vadd.f32 %v2638, %v2639
        %v2641 = vrot.slane %v2640, 2
        %v2642 = vadd.f32 %v2640, %v2641
        %v2643 = vrot.slane %v2642, 1
        %v2644 = vadd.f32 %v2642, %v2643
        %v2645 = vsel %vm2107, %v2427, 0.0
        %v2646 = vrot.slane %v2645, 4
        %v2647 = vadd.f32 %v2645, %v2646
        %v2648 = vrot.slane %v2647, 2
        %v2649 = vadd.f32 %v2647, %v2648
        %v2650 = vrot.slane %v2649, 1
        %v2651 = vadd.f32 %v2649, %v2650
        %v2652 = vrcp.pop %v2434
        %v2653 = vrcp.pop %v2441
        %v2654 = vrcp.pop %v2448
        %v2655 = vrcp.pop %v2455
        %v2656 = vrcp.pop %v2462
        %v2657 = vrcp.pop %v2469
        %v2658 = vrcp.pop %v2476
        %v2659 = vrcp.pop %v2483
        %v2660 = vrcp.pop %v2490
        %v2661 = vrcp.pop %v2497
        %v2662 = vrcp.pop %v2504
        %v2663 = vrcp.pop %v2511
        %v2664 = vrcp.pop %v2518
        %v2665 = vrcp.pop %v2525
        %v2666 = vrcp.pop %v2532
        %v2667 = vrcp.pop %v2539
        %v2668 = vrcp.pop %v2546
        %v2669 = vrcp.pop %v2553
        %v2670 = vrcp.pop %v2560
        %v2671 = vrcp.pop %v2567
        %v2672 = vrcp.pop %v2574
        %v2673 = vrcp.pop %v2581
        %v2674 = vrcp.pop %v2588
        %v2675 = vrcp.pop %v2595
        %v2676 = vrcp.pop %v2602
        %v2677 = vrcp.pop %v2609
        %v2678 = vrcp.pop %v2616
        %v2679 = vrcp.pop %v2623
        %v2680 = vrcp.pop %v2630
        %v2681 = vrcp.pop %v2637
        %v2682 = vrcp.pop %v2644
        %v2683 = vrcp.pop %v2651
        %v2684 = vmul.f32 %v2365, %v2652
        %v2685 = vmul.f32 %v2367, %v2653
        %v2686 = vmul.f32 %v2369, %v2654
        %v2687 = vmul.f32 %v2371, %v2655
        %v2688 = vmul.f32 %v2373, %v2656
        %v2689 = vmul.f32 %v2375, %v2657
        %v2690 = vmul.f32 %v2377, %v2658
        %v2691 = vmul.f32 %v2379, %v2659
        %v2692 = vmul.f32 %v2381, %v2660
        %v2693 = vmul.f32 %v2383, %v2661
        %v2694 = vmul.f32 %v2385, %v2662
        %v2695 = vmul.f32 %v2387, %v2663
        %v2696 = vmul.f32 %v2389, %v2664
        %v2697 = vmul.f32 %v2391, %v2665
        %v2698 = vmul.f32 %v2393, %v2666
        %v2699 = vmul.f32 %v2395, %v2667
        %v2700 = vmul.f32 %v2397, %v2668
        %v2701 = vmul.f32 %v2399, %v2669
        %v2702 = vmul.f32 %v2401, %v2670
        %v2703 = vmul.f32 %v2403, %v2671
        %v2704 = vmul.f32 %v2405, %v2672
        %v2705 = vmul.f32 %v2407, %v2673
        %v2706 = vmul.f32 %v2409, %v2674
        %v2707 = vmul.f32 %v2411, %v2675
        %v2708 = vmul.f32 %v2413, %v2676
        %v2709 = vmul.f32 %v2415, %v2677
        %v2710 = vmul.f32 %v2417, %v2678
        %v2711 = vmul.f32 %v2419, %v2679
        %v2712 = vmul.f32 %v2421, %v2680
        %v2713 = vmul.f32 %v2423, %v2681
        %v2714 = vmul.f32 %v2425, %v2682
        %v2715 = vmul.f32 %v2427, %v2683
        %2716 = vst.msk [vmem:[%s284] sm:$0xff] %vm2107, %v2684
        %2717 = vst.msk [vmem:[%s284 + $0x8] sm:$0xff] %vm2107, %v2685
        %2718 = vst.msk [vmem:[%s284 + $0x10] sm:$0xff] %vm2107, %v2686
        %2719 = vst.msk [vmem:[%s284 + $0x18] sm:$0xff] %vm2107, %v2687
        %2720 = vst.msk [vmem:[%s284 + $0x20] sm:$0xff] %vm2107, %v2688
        %2721 = vst.msk [vmem:[%s284 + $0x28] sm:$0xff] %vm2107, %v2689
        %2722 = vst.msk [vmem:[%s284 + $0x30] sm:$0xff] %vm2107, %v2690
        %2723 = vst.msk [vmem:[%s284 + $0x38] sm:$0xff] %vm2107, %v2691
        %2724 = vst.msk [vmem:[%s284 + $0x40] sm:$0xff] %vm2107, %v2692
        %2725 = vst.msk [vmem:[%s284 + $0x48] sm:$0xff] %vm2107, %v2693
        %2726 = vst.msk [vmem:[%s284 + $0x50] sm:$0xff] %vm2107, %v2694
        %2727 = vst.msk [vmem:[%s284 + $0x58] sm:$0xff] %vm2107, %v2695
        %2728 = vst.msk [vmem:[%s284 + $0x60] sm:$0xff] %vm2107, %v2696
        %2729 = vst.msk [vmem:[%s284 + $0x68] sm:$0xff] %vm2107, %v2697
        %2730 = vst.msk [vmem:[%s284 + $0x70] sm:$0xff] %vm2107, %v2698
        %2731 = vst.msk [vmem:[%s284 + $0x78] sm:$0xff] %vm2107, %v2699
        %2732 = vst.msk [vmem:[%s284 + $0x80] sm:$0xff] %vm2107, %v2700
        %2733 = vst.msk [vmem:[%s284 + $0x88] sm:$0xff] %vm2107, %v2701
        %2734 = vst.msk [vmem:[%s284 + $0x90] sm:$0xff] %vm2107, %v2702
        %2735 = vst.msk [vmem:[%s284 + $0x98] sm:$0xff] %vm2107, %v2703
        %2736 = vst.msk [vmem:[%s284 + $0xa0] sm:$0xff] %vm2107, %v2704
        %2737 = vst.msk [vmem:[%s284 + $0xa8] sm:$0xff] %vm2107, %v2705
        %2738 = vst.msk [vmem:[%s284 + $0xb0] sm:$0xff] %vm2107, %v2706
        %2739 = vst.msk [vmem:[%s284 + $0xb8] sm:$0xff] %vm2107, %v2707
        %2740 = vst.msk [vmem:[%s284 + $0xc0] sm:$0xff] %vm2107, %v2708
        %2741 = vst.msk [vmem:[%s284 + $0xc8] sm:$0xff] %vm2107, %v2709
        %2742 = vst.msk [vmem:[%s284 + $0xd0] sm:$0xff] %vm2107, %v2710
        %2743 = vst.msk [vmem:[%s284 + $0xd8] sm:$0xff] %vm2107, %v2711
        %2744 = vst.msk [vmem:[%s284 + $0xe0] sm:$0xff] %vm2107, %v2712
        %2745 = vst.msk [vmem:[%s284 + $0xe8] sm:$0xff] %vm2107, %v2713
        %2746 = vst.msk [vmem:[%s284 + $0xf0] sm:$0xff] %vm2107, %v2714
        %2747 = vst.msk [vmem:[%s284 + $0xf8] sm:$0xff] %vm2107, %v2715
        %s2748 = sand.u32 %s127, 1
        %s2749 = scalar_lea.sflag [#allocation4], %s2748
        %s2750 = sand.u32 %s127, 1
        %s2751 = smul.addr %s2750, 256
        %s2752 = scalar_lea.vmem [#allocation10], %s2751
        // Predicated region
        $region53: #{tpu_custom_call.1} parent=35 // pred_check
          %p2753 = pneg %p137
        $region54: #{tpu_custom_call.1} parent=35 // pred_check_branch
          %2755 = sbr.rel (%p2753) target = $region56
        $region55: #{tpu_custom_call.1} parent=35 // pred_region
          %s2756 = smul.u32 32, %s25
          %s2758 = ssub.s32 4096, 4096
          %2759 = vsyncadd %s2749, %s2758
          %s2760 = smul.addr %s2756, 128
          %s2761 = scalar_lea.hbm %s4, %s2760
          %s2762 = sshll.u32 %s2752, 4
          %s2763 = int_to_ptr.vmem [resolvable:$true] %s2762
          %2768 = dma.vmem_to_hbm [thread:$0]  %s2763, 4096, %s2761, %s2749, 128, 128, 8
        $region56: #{tpu_custom_call.1} parent=35 // pred_fallthru
          _
      $region36: #{tpu_custom_call.1} parent=5 // pred_fallthru
        _
      %p2769 = scmp.le.s32.totalorder 2, %s20
      // Predicated region
      $region57: #{tpu_custom_call.1} parent=5 // pred_check
        %p2770 = pneg %p2769
      $region58: #{tpu_custom_call.1} parent=5 // pred_check_branch
        %2772 = sbr.rel (%p2770) target = $region60
      $region59: #{tpu_custom_call.1} parent=5 // pred_region
        %s2773 = ssub.s32 %s20, 2
        // Predicated region
        $region61: #{tpu_custom_call.1} parent=59 // pred_check
          %p2774 = pneg %p143
        $region62: #{tpu_custom_call.1} parent=59 // pred_check_branch
          %2776 = sbr.rel (%p2774) target = $region64
        $region63: #{tpu_custom_call.1} parent=59 // pred_region
          %s2777 = sand.u32 %s128, 1
          %s2778 = scalar_lea.sflag [#allocation4], %s2777
          %s2779 = sand.u32 %s128, 1
          %s2780 = smul.addr %s2779, 256
          %s2781 = scalar_lea.vmem [#allocation10], %s2780
          %2782 = dma.done %s2778, 4096
        $region64: #{tpu_custom_call.1} parent=59 // pred_fallthru
          _
      $region60: #{tpu_custom_call.1} parent=5 // pred_fallthru
        _
    $region6: #{tpu_custom_call.1} parent=1 // loop_footer
      %s24 = sadd.s32 1, %s20
    $region7: #{tpu_custom_call.1} parent=1 // loop_footer_branch
      %19 = sbr.rel target = $region3
    $region8: #{tpu_custom_call.1} parent=1 // loop_exit
      _
    %2783 = vsyncpa [#allocation3], 1
    %s2784 = scalar_lea.sflag [#allocation3], 1
    %2785 = vsyncpa %s2784, 1
    %2786 = vsyncpa [#allocation6], 1
    %s2787 = scalar_lea.sflag [#allocation6], 1
    %2788 = vsyncpa %s2787, 1
    %2789 = vsyncpa [#allocation9], 1
    %2790 = vsyncpa [#allocation4], 1
    %s2791 = scalar_lea.sflag [#allocation4], 1
    %2792 = vsyncpa %s2791, 1

</llo_original>
